<compile_context>
chip_gen: v7x
topology: tpu7x:2x2x1
jax: 0.10.0
libtpu: 0.0.40
codegen_flags: <defaults>
</compile_context>

<pallas_src>
import itertools

import jax
import jax.numpy as jnp
from jax.experimental import pallas as pl
from jax.experimental.pallas import tpu as pltpu


def _round_up(n, m):
    return ((n + m - 1) // m) * m


def _make_kernel(H, W, C, Hp, NCp):
    P = H * W
    inv_p = 1.0 / P

    def kernel(x_ref, wconv_ref, bconv_ref, wcls_ref, bcls_ref, out_ref):
        # x_ref:     (1, H+2, W+2, C)  f32   one zero-padded image (NHWC)
        # wconv_ref: (9, C, Hp)        bf16  per-offset conv weights (hidden padded)
        # bconv_ref: (1, Hp)           f32
        # wcls_ref:  (Hp, NCp)         f32
        # bcls_ref:  (1, NCp)          f32
        # out_ref:   (1, 1, NCp)       f32
        feats = jnp.zeros((P, Hp), dtype=jnp.float32)
        # Conv2d(k=3, pad=1) as 9 shifted-window matmuls (implicit im2col, MXU,
        # bf16 operands, f32 accumulate).
        for idx, (dh, dw) in enumerate(itertools.product(range(3), range(3))):
            win = x_ref[0, dh:dh + H, dw:dw + W, :]          # (H, W, C)
            win = win.reshape(P, C).astype(jnp.bfloat16)     # (P, C)
            feats = feats + jnp.dot(win, wconv_ref[idx],
                                    preferred_element_type=jnp.float32)
        feats = jnp.maximum(feats + bconv_ref[...], 0.0)     # bias + ReLU (f32)
        # Global average pool: plain row reduction (hides under the MXU work).
        pooled = jnp.sum(feats, axis=0, keepdims=True) * inv_p        # (1, Hp)
        logits = jnp.dot(pooled, wcls_ref[...],
                         preferred_element_type=jnp.float32)          # (1, NCp)
        out_ref[...] = (logits + bcls_ref[...]).reshape(1, 1, NCp)

    return kernel


def fc_classifier(x, w_conv, b_conv, w_cls, b_cls):
    """x: (B, C, H, W) NCHW.  Returns logits (B, num_classes), float32."""
    B, C, H, W = x.shape
    hidden = w_conv.shape[0]
    num_classes = w_cls.shape[0]
    P = H * W
    Hp = _round_up(hidden, 128)        # lane-dense hidden
    NCp = _round_up(num_classes, 128)  # lane-dense classifier output

    # ---- layout-only host prep (no 9x patch materialization) ----
    xp = jnp.pad(jnp.transpose(x, (0, 2, 3, 1)).astype(jnp.float32),
                 ((0, 0), (1, 1), (1, 1), (0, 0)))            # (B, H+2, W+2, C)
    # (hidden, C, 3, 3) -> (dh, dw, C, hidden) -> (9, C, Hp), zero-padded, bf16.
    w_off = jnp.transpose(w_conv.astype(jnp.float32), (2, 3, 1, 0)).reshape(9, C, hidden)
    w_off = jnp.pad(w_off, ((0, 0), (0, 0), (0, Hp - hidden))).astype(jnp.bfloat16)
    bconv_row = jnp.pad(b_conv.astype(jnp.float32).reshape(1, hidden),
                        ((0, 0), (0, Hp - hidden)))
    wcls_mat = jnp.pad(jnp.transpose(w_cls.astype(jnp.float32)),
                       ((0, Hp - hidden), (0, NCp - num_classes)))
    bcls_row = jnp.pad(b_cls.astype(jnp.float32).reshape(1, num_classes),
                       ((0, 0), (0, NCp - num_classes)))

    kernel = _make_kernel(H, W, C, Hp, NCp)

    flops = 2 * B * P * (C * 9) * Hp + 2 * B * Hp * NCp
    bytes_accessed = (xp.size * 4 + w_off.size * 2 + bconv_row.size * 4 +
                      wcls_mat.size * 4 + bcls_row.size * 4 + B * NCp * 4)

    out = pl.pallas_call(
        kernel,
        out_shape=jax.ShapeDtypeStruct((B, 1, NCp), jnp.float32),
        grid_spec=pltpu.PrefetchScalarGridSpec(
            num_scalar_prefetch=0,
            grid=(B,),  # one image per step; image DMA double-buffered by BlockSpec
            in_specs=[
                pl.BlockSpec((1, H + 2, W + 2, C), lambda b: (b, 0, 0, 0)),
                pl.BlockSpec((9, C, Hp), lambda b: (0, 0, 0)),
                pl.BlockSpec((1, Hp), lambda b: (0, 0)),
                pl.BlockSpec((Hp, NCp), lambda b: (0, 0)),
                pl.BlockSpec((1, NCp), lambda b: (0, 0)),
            ],
            out_specs=pl.BlockSpec((1, 1, NCp), lambda b: (b, 0, 0)),
        ),
        compiler_params=pltpu.CompilerParams(
            dimension_semantics=("parallel",),          # 2 TCs on v7x split batches
            vmem_limit_bytes=32 * 1024 * 1024),
        cost_estimate=pl.CostEstimate(flops=int(flops), transcendentals=0,
                                      bytes_accessed=int(bytes_accessed)),
    )(xp, w_off, bconv_row, wcls_mat, bcls_row)

    return out[:, 0, :num_classes]


def reference(x, w_conv, b_conv, w_cls, b_cls):
    """Pure-JAX f32 reference matching the PyTorch semantics."""
    feats = jax.lax.conv_general_dilated(
        x.astype(jnp.float32), w_conv.astype(jnp.float32),
        window_strides=(1, 1), padding="SAME",
        dimension_numbers=("NCHW", "OIHW", "NCHW"))
    feats = jax.nn.relu(feats + b_conv.reshape(1, -1, 1, 1))
    pooled = feats.mean(axis=(2, 3))                              # (B, hidden)
    return pooled @ w_cls.T + b_cls


if __name__ == "__main__":
    B, C, H, W = 2, 4, 16, 16
    hidden, num_classes = 32, 10

    key = jax.random.PRNGKey(0)
    kx, kw1, kb1, kw2, kb2 = jax.random.split(key, 5)

    x = jax.random.normal(kx, (B, C, H, W), dtype=jnp.float32)
    w_conv = jax.random.normal(kw1, (hidden, C, 3, 3), dtype=jnp.float32) * 0.1
    b_conv = jax.random.normal(kb1, (hidden,), dtype=jnp.float32) * 0.1
    w_cls = jax.random.normal(kw2, (num_classes, hidden), dtype=jnp.float32) * 0.1
    b_cls = jax.random.normal(kb2, (num_classes,), dtype=jnp.float32) * 0.1

    out = fc_classifier(x, w_conv, b_conv, w_cls, b_cls)
    out = jax.block_until_ready(out)

    ref = reference(x, w_conv, b_conv, w_cls, b_cls)
    assert out.shape == (B, num_classes)
    # Conv matmul runs with bf16 operands (f32 accumulate) -> looser tolerance
    # vs. the full-f32 reference.
    assert jnp.allclose(out, ref, atol=2e-2, rtol=2e-2), "mismatch vs reference"

    print("KERNEL_OK")
</pallas_src>

<mosaic_0001>
module attributes {stable_mosaic.version = 11 : i64} {
  func.func @kernel(%arg0: i32, %arg1: memref<1x18x18x4xf32, #tpu.memory_space<vmem>>, %arg2: memref<9x4x128xbf16, #tpu.memory_space<vmem>>, %arg3: memref<1x128xf32, #tpu.memory_space<vmem>>, %arg4: memref<128x128xf32, #tpu.memory_space<vmem>>, %arg5: memref<1x128xf32, #tpu.memory_space<vmem>>, %arg6: memref<1x1x128xf32, #tpu.memory_space<vmem>>) attributes {dimension_semantics = [#tpu.dimension_semantics<parallel>], iteration_bounds = array<i64: 2>, scalar_prefetch = 0 : i64, scratch_operands = 0 : i64, tpu.core_type = #tpu.core_type<tc>, window_params = [{transform_indices = @transform_0, window_bounds = array<i64: 1, 18, 18, 4>}, {pipeline_mode = #tpu.pipeline_mode<synchronous>, transform_indices = @transform_1, window_bounds = array<i64: 9, 4, 128>}, {pipeline_mode = #tpu.pipeline_mode<synchronous>, transform_indices = @transform_2, window_bounds = array<i64: 1, 128>}, {pipeline_mode = #tpu.pipeline_mode<synchronous>, transform_indices = @transform_3, window_bounds = array<i64: 128, 128>}, {pipeline_mode = #tpu.pipeline_mode<synchronous>, transform_indices = @transform_4, window_bounds = array<i64: 1, 128>}, {transform_indices = @transform_5, window_bounds = array<i64: 1, 1, 128>}]} {
    %cst = arith.constant 0.000000e+00 : f32
    %0 = vector.broadcast %cst : f32 to vector<256x128xf32>
    %c0 = arith.constant 0 : index
    %c0_0 = arith.constant 0 : index
    %c0_1 = arith.constant 0 : index
    %c0_2 = arith.constant 0 : index
    %1 = vector.load %arg1[%c0, %c0_0, %c0_1, %c0_2] : memref<1x18x18x4xf32, #tpu.memory_space<vmem>>, vector<1x16x16x4xf32>
    %2 = vector.shape_cast %1 : vector<1x16x16x4xf32> to vector<16x16x4xf32>
    %3 = vector.shape_cast %2 : vector<16x16x4xf32> to vector<256x4xf32>
    %4 = arith.truncf %3 : vector<256x4xf32> to vector<256x4xbf16>
    %c0_3 = arith.constant 0 : index
    %c0_4 = arith.constant 0 : index
    %c0_5 = arith.constant 0 : index
    %5 = vector.load %arg2[%c0_3, %c0_4, %c0_5] : memref<9x4x128xbf16, #tpu.memory_space<vmem>>, vector<1x4x128xbf16>
    %6 = vector.shape_cast %5 : vector<1x4x128xbf16> to vector<4x128xbf16>
    %cst_6 = arith.constant dense<0.000000e+00> : vector<256x128xf32>
    %7 = tpu.matmul %4, %6, %cst_6 {dimension_numbers = #tpu.dot_dimension_numbers<[1], [0], [0], [1], [0, 0, 1, 1], [], []>} : vector<256x4xbf16>, vector<4x128xbf16>, vector<256x128xf32> -> vector<256x128xf32>
    %8 = arith.addf %0, %7 : vector<256x128xf32>
    %c0_7 = arith.constant 0 : index
    %c0_8 = arith.constant 0 : index
    %c1 = arith.constant 1 : index
    %c0_9 = arith.constant 0 : index
    %9 = vector.load %arg1[%c0_7, %c0_8, %c1, %c0_9] : memref<1x18x18x4xf32, #tpu.memory_space<vmem>>, vector<1x16x16x4xf32>
    %10 = vector.shape_cast %9 : vector<1x16x16x4xf32> to vector<16x16x4xf32>
    %11 = vector.shape_cast %10 : vector<16x16x4xf32> to vector<256x4xf32>
    %12 = arith.truncf %11 : vector<256x4xf32> to vector<256x4xbf16>
    %c1_10 = arith.constant 1 : index
    %c0_11 = arith.constant 0 : index
    %c0_12 = arith.constant 0 : index
    %13 = vector.load %arg2[%c1_10, %c0_11, %c0_12] : memref<9x4x128xbf16, #tpu.memory_space<vmem>>, vector<1x4x128xbf16>
    %14 = vector.shape_cast %13 : vector<1x4x128xbf16> to vector<4x128xbf16>
    %cst_13 = arith.constant dense<0.000000e+00> : vector<256x128xf32>
    %15 = tpu.matmul %12, %14, %cst_13 {dimension_numbers = #tpu.dot_dimension_numbers<[1], [0], [0], [1], [0, 0, 1, 1], [], []>} : vector<256x4xbf16>, vector<4x128xbf16>, vector<256x128xf32> -> vector<256x128xf32>
    %16 = arith.addf %8, %15 : vector<256x128xf32>
    %c0_14 = arith.constant 0 : index
    %c0_15 = arith.constant 0 : index
    %c2 = arith.constant 2 : index
    %c0_16 = arith.constant 0 : index
    %17 = vector.load %arg1[%c0_14, %c0_15, %c2, %c0_16] : memref<1x18x18x4xf32, #tpu.memory_space<vmem>>, vector<1x16x16x4xf32>
    %18 = vector.shape_cast %17 : vector<1x16x16x4xf32> to vector<16x16x4xf32>
    %19 = vector.shape_cast %18 : vector<16x16x4xf32> to vector<256x4xf32>
    %20 = arith.truncf %19 : vector<256x4xf32> to vector<256x4xbf16>
    %c2_17 = arith.constant 2 : index
    %c0_18 = arith.constant 0 : index
    %c0_19 = arith.constant 0 : index
    %21 = vector.load %arg2[%c2_17, %c0_18, %c0_19] : memref<9x4x128xbf16, #tpu.memory_space<vmem>>, vector<1x4x128xbf16>
    %22 = vector.shape_cast %21 : vector<1x4x128xbf16> to vector<4x128xbf16>
    %cst_20 = arith.constant dense<0.000000e+00> : vector<256x128xf32>
    %23 = tpu.matmul %20, %22, %cst_20 {dimension_numbers = #tpu.dot_dimension_numbers<[1], [0], [0], [1], [0, 0, 1, 1], [], []>} : vector<256x4xbf16>, vector<4x128xbf16>, vector<256x128xf32> -> vector<256x128xf32>
    %24 = arith.addf %16, %23 : vector<256x128xf32>
    %c0_21 = arith.constant 0 : index
    %c1_22 = arith.constant 1 : index
    %c0_23 = arith.constant 0 : index
    %c0_24 = arith.constant 0 : index
    %25 = vector.load %arg1[%c0_21, %c1_22, %c0_23, %c0_24] : memref<1x18x18x4xf32, #tpu.memory_space<vmem>>, vector<1x16x16x4xf32>
    %26 = vector.shape_cast %25 : vector<1x16x16x4xf32> to vector<16x16x4xf32>
    %27 = vector.shape_cast %26 : vector<16x16x4xf32> to vector<256x4xf32>
    %28 = arith.truncf %27 : vector<256x4xf32> to vector<256x4xbf16>
    %c3 = arith.constant 3 : index
    %c0_25 = arith.constant 0 : index
    %c0_26 = arith.constant 0 : index
    %29 = vector.load %arg2[%c3, %c0_25, %c0_26] : memref<9x4x128xbf16, #tpu.memory_space<vmem>>, vector<1x4x128xbf16>
    %30 = vector.shape_cast %29 : vector<1x4x128xbf16> to vector<4x128xbf16>
    %cst_27 = arith.constant dense<0.000000e+00> : vector<256x128xf32>
    %31 = tpu.matmul %28, %30, %cst_27 {dimension_numbers = #tpu.dot_dimension_numbers<[1], [0], [0], [1], [0, 0, 1, 1], [], []>} : vector<256x4xbf16>, vector<4x128xbf16>, vector<256x128xf32> -> vector<256x128xf32>
    %32 = arith.addf %24, %31 : vector<256x128xf32>
    %c0_28 = arith.constant 0 : index
    %c1_29 = arith.constant 1 : index
    %c1_30 = arith.constant 1 : index
    %c0_31 = arith.constant 0 : index
    %33 = vector.load %arg1[%c0_28, %c1_29, %c1_30, %c0_31] : memref<1x18x18x4xf32, #tpu.memory_space<vmem>>, vector<1x16x16x4xf32>
    %34 = vector.shape_cast %33 : vector<1x16x16x4xf32> to vector<16x16x4xf32>
    %35 = vector.shape_cast %34 : vector<16x16x4xf32> to vector<256x4xf32>
    %36 = arith.truncf %35 : vector<256x4xf32> to vector<256x4xbf16>
    %c4 = arith.constant 4 : index
    %c0_32 = arith.constant 0 : index
    %c0_33 = arith.constant 0 : index
    %37 = vector.load %arg2[%c4, %c0_32, %c0_33] : memref<9x4x128xbf16, #tpu.memory_space<vmem>>, vector<1x4x128xbf16>
    %38 = vector.shape_cast %37 : vector<1x4x128xbf16> to vector<4x128xbf16>
    %cst_34 = arith.constant dense<0.000000e+00> : vector<256x128xf32>
    %39 = tpu.matmul %36, %38, %cst_34 {dimension_numbers = #tpu.dot_dimension_numbers<[1], [0], [0], [1], [0, 0, 1, 1], [], []>} : vector<256x4xbf16>, vector<4x128xbf16>, vector<256x128xf32> -> vector<256x128xf32>
    %40 = arith.addf %32, %39 : vector<256x128xf32>
    %c0_35 = arith.constant 0 : index
    %c1_36 = arith.constant 1 : index
    %c2_37 = arith.constant 2 : index
    %c0_38 = arith.constant 0 : index
    %41 = vector.load %arg1[%c0_35, %c1_36, %c2_37, %c0_38] : memref<1x18x18x4xf32, #tpu.memory_space<vmem>>, vector<1x16x16x4xf32>
    %42 = vector.shape_cast %41 : vector<1x16x16x4xf32> to vector<16x16x4xf32>
    %43 = vector.shape_cast %42 : vector<16x16x4xf32> to vector<256x4xf32>
    %44 = arith.truncf %43 : vector<256x4xf32> to vector<256x4xbf16>
    %c5 = arith.constant 5 : index
    %c0_39 = arith.constant 0 : index
    %c0_40 = arith.constant 0 : index
    %45 = vector.load %arg2[%c5, %c0_39, %c0_40] : memref<9x4x128xbf16, #tpu.memory_space<vmem>>, vector<1x4x128xbf16>
    %46 = vector.shape_cast %45 : vector<1x4x128xbf16> to vector<4x128xbf16>
    %cst_41 = arith.constant dense<0.000000e+00> : vector<256x128xf32>
    %47 = tpu.matmul %44, %46, %cst_41 {dimension_numbers = #tpu.dot_dimension_numbers<[1], [0], [0], [1], [0, 0, 1, 1], [], []>} : vector<256x4xbf16>, vector<4x128xbf16>, vector<256x128xf32> -> vector<256x128xf32>
    %48 = arith.addf %40, %47 : vector<256x128xf32>
    %c0_42 = arith.constant 0 : index
    %c2_43 = arith.constant 2 : index
    %c0_44 = arith.constant 0 : index
    %c0_45 = arith.constant 0 : index
    %49 = vector.load %arg1[%c0_42, %c2_43, %c0_44, %c0_45] : memref<1x18x18x4xf32, #tpu.memory_space<vmem>>, vector<1x16x16x4xf32>
    %50 = vector.shape_cast %49 : vector<1x16x16x4xf32> to vector<16x16x4xf32>
    %51 = vector.shape_cast %50 : vector<16x16x4xf32> to vector<256x4xf32>
    %52 = arith.truncf %51 : vector<256x4xf32> to vector<256x4xbf16>
    %c6 = arith.constant 6 : index
    %c0_46 = arith.constant 0 : index
    %c0_47 = arith.constant 0 : index
    %53 = vector.load %arg2[%c6, %c0_46, %c0_47] : memref<9x4x128xbf16, #tpu.memory_space<vmem>>, vector<1x4x128xbf16>
    %54 = vector.shape_cast %53 : vector<1x4x128xbf16> to vector<4x128xbf16>
    %cst_48 = arith.constant dense<0.000000e+00> : vector<256x128xf32>
    %55 = tpu.matmul %52, %54, %cst_48 {dimension_numbers = #tpu.dot_dimension_numbers<[1], [0], [0], [1], [0, 0, 1, 1], [], []>} : vector<256x4xbf16>, vector<4x128xbf16>, vector<256x128xf32> -> vector<256x128xf32>
    %56 = arith.addf %48, %55 : vector<256x128xf32>
    %c0_49 = arith.constant 0 : index
    %c2_50 = arith.constant 2 : index
    %c1_51 = arith.constant 1 : index
    %c0_52 = arith.constant 0 : index
    %57 = vector.load %arg1[%c0_49, %c2_50, %c1_51, %c0_52] : memref<1x18x18x4xf32, #tpu.memory_space<vmem>>, vector<1x16x16x4xf32>
    %58 = vector.shape_cast %57 : vector<1x16x16x4xf32> to vector<16x16x4xf32>
    %59 = vector.shape_cast %58 : vector<16x16x4xf32> to vector<256x4xf32>
    %60 = arith.truncf %59 : vector<256x4xf32> to vector<256x4xbf16>
    %c7 = arith.constant 7 : index
    %c0_53 = arith.constant 0 : index
    %c0_54 = arith.constant 0 : index
    %61 = vector.load %arg2[%c7, %c0_53, %c0_54] : memref<9x4x128xbf16, #tpu.memory_space<vmem>>, vector<1x4x128xbf16>
    %62 = vector.shape_cast %61 : vector<1x4x128xbf16> to vector<4x128xbf16>
    %cst_55 = arith.constant dense<0.000000e+00> : vector<256x128xf32>
    %63 = tpu.matmul %60, %62, %cst_55 {dimension_numbers = #tpu.dot_dimension_numbers<[1], [0], [0], [1], [0, 0, 1, 1], [], []>} : vector<256x4xbf16>, vector<4x128xbf16>, vector<256x128xf32> -> vector<256x128xf32>
    %64 = arith.addf %56, %63 : vector<256x128xf32>
    %c0_56 = arith.constant 0 : index
    %c2_57 = arith.constant 2 : index
    %c2_58 = arith.constant 2 : index
    %c0_59 = arith.constant 0 : index
    %65 = vector.load %arg1[%c0_56, %c2_57, %c2_58, %c0_59] : memref<1x18x18x4xf32, #tpu.memory_space<vmem>>, vector<1x16x16x4xf32>
    %66 = vector.shape_cast %65 : vector<1x16x16x4xf32> to vector<16x16x4xf32>
    %67 = vector.shape_cast %66 : vector<16x16x4xf32> to vector<256x4xf32>
    %68 = arith.truncf %67 : vector<256x4xf32> to vector<256x4xbf16>
    %c8 = arith.constant 8 : index
    %c0_60 = arith.constant 0 : index
    %c0_61 = arith.constant 0 : index
    %69 = vector.load %arg2[%c8, %c0_60, %c0_61] : memref<9x4x128xbf16, #tpu.memory_space<vmem>>, vector<1x4x128xbf16>
    %70 = vector.shape_cast %69 : vector<1x4x128xbf16> to vector<4x128xbf16>
    %cst_62 = arith.constant dense<0.000000e+00> : vector<256x128xf32>
    %71 = tpu.matmul %68, %70, %cst_62 {dimension_numbers = #tpu.dot_dimension_numbers<[1], [0], [0], [1], [0, 0, 1, 1], [], []>} : vector<256x4xbf16>, vector<4x128xbf16>, vector<256x128xf32> -> vector<256x128xf32>
    %72 = arith.addf %64, %71 : vector<256x128xf32>
    %c0_63 = arith.constant 0 : index
    %c0_64 = arith.constant 0 : index
    %73 = vector.load %arg3[%c0_63, %c0_64] : memref<1x128xf32, #tpu.memory_space<vmem>>, vector<1x128xf32>
    %74 = vector.broadcast %73 : vector<1x128xf32> to vector<256x128xf32>
    %75 = arith.addf %72, %74 : vector<256x128xf32>
    %cst_65 = arith.constant 0.000000e+00 : f32
    %76 = vector.broadcast %cst_65 : f32 to vector<256x128xf32>
    %77 = arith.maximumf %75, %76 : vector<256x128xf32>
    %cst_66 = arith.constant dense<0.000000e+00> : vector<128xf32>
    %78 = vector.multi_reduction <add>, %77, %cst_66 [0] : vector<256x128xf32> to vector<128xf32>
    %79 = vector.shape_cast %78 : vector<128xf32> to vector<1x128xf32>
    %cst_67 = arith.constant 3.906250e-03 : f32
    %80 = vector.broadcast %cst_67 : f32 to vector<1x128xf32>
    %81 = arith.mulf %79, %80 : vector<1x128xf32>
    %c0_68 = arith.constant 0 : index
    %c0_69 = arith.constant 0 : index
    %82 = vector.load %arg4[%c0_68, %c0_69] : memref<128x128xf32, #tpu.memory_space<vmem>>, vector<128x128xf32>
    %cst_70 = arith.constant dense<0.000000e+00> : vector<1x128xf32>
    %83 = tpu.matmul %81, %82, %cst_70 {dimension_numbers = #tpu.dot_dimension_numbers<[1], [0], [0], [1], [0, 0, 1, 1], [], []>} : vector<1x128xf32>, vector<128x128xf32>, vector<1x128xf32> -> vector<1x128xf32>
    %c0_71 = arith.constant 0 : index
    %c0_72 = arith.constant 0 : index
    %84 = vector.load %arg5[%c0_71, %c0_72] : memref<1x128xf32, #tpu.memory_space<vmem>>, vector<1x128xf32>
    %85 = arith.addf %83, %84 : vector<1x128xf32>
    %86 = vector.shape_cast %85 : vector<1x128xf32> to vector<1x1x128xf32>
    %c0_73 = arith.constant 0 : index
    %c0_74 = arith.constant 0 : index
    %c0_75 = arith.constant 0 : index
    %87 = vector.load %arg6[%c0_73, %c0_74, %c0_75] : memref<1x1x128xf32, #tpu.memory_space<vmem>>, vector<1x1x128xf32>
    tpu.vector_store %arg6[%c0_73, %c0_74, %c0_75], %86 {strides = array<i32>} : memref<1x1x128xf32, #tpu.memory_space<vmem>>, vector<1x1x128xf32>,
    return
  }
  func.func @transform_0(%arg0: i32) -> (i32, i32, i32, i32) {
    %c0_i32 = arith.constant 0 : i32
    %c0_i32_0 = arith.constant 0 : i32
    %c0_i32_1 = arith.constant 0 : i32
    %c0_i32_2 = arith.constant 0 : i32
    return %arg0, %c0_i32, %c0_i32_0, %c0_i32_1 : i32, i32, i32, i32
  }
  func.func @transform_1(%arg0: i32) -> (i32, i32, i32) {
    %c0_i32 = arith.constant 0 : i32
    %c0_i32_0 = arith.constant 0 : i32
    %c0_i32_1 = arith.constant 0 : i32
    %c0_i32_2 = arith.constant 0 : i32
    return %c0_i32, %c0_i32_0, %c0_i32_1 : i32, i32, i32
  }
  func.func @transform_2(%arg0: i32) -> (i32, i32) {
    %c0_i32 = arith.constant 0 : i32
    %c0_i32_0 = arith.constant 0 : i32
    %c0_i32_1 = arith.constant 0 : i32
    return %c0_i32, %c0_i32_0 : i32, i32
  }
  func.func @transform_3(%arg0: i32) -> (i32, i32) {
    %c0_i32 = arith.constant 0 : i32
    %c0_i32_0 = arith.constant 0 : i32
    %c0_i32_1 = arith.constant 0 : i32
    return %c0_i32, %c0_i32_0 : i32, i32
  }
  func.func @transform_4(%arg0: i32) -> (i32, i32) {
    %c0_i32 = arith.constant 0 : i32
    %c0_i32_0 = arith.constant 0 : i32
    %c0_i32_1 = arith.constant 0 : i32
    return %c0_i32, %c0_i32_0 : i32, i32
  }
  func.func @transform_5(%arg0: i32) -> (i32, i32, i32) {
    %c0_i32 = arith.constant 0 : i32
    %c0_i32_0 = arith.constant 0 : i32
    %c0_i32_1 = arith.constant 0 : i32
    return %arg0, %c0_i32, %c0_i32_0 : i32, i32, i32
  }
}

</mosaic_0001>

<llo_original>
// kernel: tpu_custom_call.1
$region0: #{tpu_custom_call.1}
  #allocation0 [shape = 'u32[]', space=smem, size = 0x4, offset = 0x4, fixed_abs, tag = 'smem constant byte address 0x4 - core index']
  #allocation1 [shape = 'u32[144,128]{1,0:T(1,128)}', space=vmem, size = 0x12000, scoped, tag = 'internal scratch']
  %s0 = inlined_call_operand.vmem [shape: f32[2,18,18,4], index: 0, kind: input, shape index: {}]
  %s1 = inlined_call_operand.vmem [shape: bf16[9,4,128], index: 1, kind: input, shape index: {}]
  %s2 = inlined_call_operand.vmem [shape: f32[1,128], index: 2, kind: input, shape index: {}]
  %s3 = inlined_call_operand.vmem [shape: f32[128,128], index: 3, kind: input, shape index: {}]
  %s4 = inlined_call_operand.vmem [shape: f32[1,128], index: 4, kind: input, shape index: {}]
  %s5 = inlined_call_operand.hbm [shape: f32[2,1,128], index: 5, kind: output, shape index: {}]
  %s6 = sld [smem:[#allocation0]]
  $region53: #{tpu_custom_call.1} parent=0
    _
  %s8 = ssub.s32 1, %s6
  %s9 = scalar_select 0, %s8, %s6
  $region1: #{tpu_custom_call.1} parent=0
    #allocation2 [shape = 'u8[1024]{0}', space=vmem, size = 0x400, scoped, tag = 'output window, operand 0']
    #allocation3 [shape = 's32[2]{0}', space=sflag, size = 0x8, scoped, tag = 'scoped memory for tpu_custom_call.1']
    %10 = vsyncpa [#allocation3], 0
    %s11 = scalar_lea.sflag [#allocation3], 1
    %12 = vsyncpa %s11, 0
    loop: start=0, step=1, limit=4
    $region2: #{tpu_custom_call.1} parent=1 // loop_pre_header
      _
    $region3: #{tpu_custom_call.1} parent=1 // loop_header
      %s14 = sphi 0, %s18
      %p15 = scmp.ge.s32.totalorder %s14, 4
      %s24 = sphi 0, %s26
      %s27 = sphi 0, %s24
      %s28 = sphi 0, %s27
      %s44 = sphi 0, %s28
      %s48 = sphi 0, %s48
      %s50 = sphi 0, %s48
      %s51 = sphi 0, %s50
      %s65 = sphi 0, %s51
      %s69 = sphi 0, %s69
      %s71 = sphi 0, %s69
      %s72 = sphi 0, %s71
      %s86 = sphi 0, %s72
      %s90 = sphi 0, %s90
      %s92 = sphi 0, %s90
      %s93 = sphi 0, %s92
      %s107 = sphi 0, %s93
      %s111 = sphi 0, %s111
      %s113 = sphi 0, %s111
      %s114 = sphi 0, %s113
      %s128 = sphi 0, %s114
      %s134 = sphi 0, %s136
      %s137 = sphi 0, %s134
      %s138 = sphi 0, %s137
      %s154 = sphi 0, %s138
    $region4: #{tpu_custom_call.1} parent=1 // loop_header_branch
      %17 = sbr.rel (%p15) target = $region8
    $region5: #{tpu_custom_call.1} parent=1 // loop_body
      %s19 = ssub.s32 %s14, 1
      %s20 = ssub.s32 %s14, 2
      %s21 = sadd.s32 %s14, 1
      %s22 = ssub.s32 %s14, %s21
      %p23 = scmp.eq.s32.totalorder %s22, 0
      %s25 = sadd.s32 %s24, 1
      %s26 = scalar_select %p23, %s24, %s25
      %p29 = pneg %p23
      %p30 = scmp.eq.s32.totalorder %s14, 1
      %p31 = por %p29, %p30
      %p32 = scmp.ne.s32.totalorder %s24, %s27
      %p33 = scmp.eq.s32.totalorder %s14, 0
      %p34 = por %p32, %p33
      %p35 = scmp.ne.s32.totalorder %s24, %s27
      %p36 = scmp.eq.s32.totalorder %s19, 1
      %p37 = por %p35, %p36
      %p38 = scmp.ne.s32.totalorder %s27, %s28
      %p39 = scmp.eq.s32.totalorder %s19, 0
      %p40 = por %p38, %p39
      %p41 = scmp.ne.s32.totalorder %s27, %s28
      %p42 = scmp.eq.s32.totalorder %s20, 1
      %p43 = por %p41, %p42
      %p45 = scmp.ne.s32.totalorder %s28, %s44
      %p46 = scmp.eq.s32.totalorder %s20, 0
      %p47 = por %p45, %p46
      %s49 = sadd.s32 %s48, 1
      %p52 = scmp.eq.s32.totalorder %s14, 1
      %p53 = scmp.ne.s32.totalorder %s48, %s50
      %p54 = scmp.eq.s32.totalorder %s14, 0
      %p55 = por %p53, %p54
      %p56 = scmp.ne.s32.totalorder %s48, %s50
      %p57 = scmp.eq.s32.totalorder %s19, 1
      %p58 = por %p56, %p57
      %p59 = scmp.ne.s32.totalorder %s50, %s51
      %p60 = scmp.eq.s32.totalorder %s19, 0
      %p61 = por %p59, %p60
      %p62 = scmp.ne.s32.totalorder %s50, %s51
      %p63 = scmp.eq.s32.totalorder %s20, 1
      %p64 = por %p62, %p63
      %p66 = scmp.ne.s32.totalorder %s51, %s65
      %p67 = scmp.eq.s32.totalorder %s20, 0
      %p68 = por %p66, %p67
      %s70 = sadd.s32 %s69, 1
      %p73 = scmp.eq.s32.totalorder %s14, 1
      %p74 = scmp.ne.s32.totalorder %s69, %s71
      %p75 = scmp.eq.s32.totalorder %s14, 0
      %p76 = por %p74, %p75
      %p77 = scmp.ne.s32.totalorder %s69, %s71
      %p78 = scmp.eq.s32.totalorder %s19, 1
      %p79 = por %p77, %p78
      %p80 = scmp.ne.s32.totalorder %s71, %s72
      %p81 = scmp.eq.s32.totalorder %s19, 0
      %p82 = por %p80, %p81
      %p83 = scmp.ne.s32.totalorder %s71, %s72
      %p84 = scmp.eq.s32.totalorder %s20, 1
      %p85 = por %p83, %p84
      %p87 = scmp.ne.s32.totalorder %s72, %s86
      %p88 = scmp.eq.s32.totalorder %s20, 0
      %p89 = por %p87, %p88
      %s91 = sadd.s32 %s90, 1
      %p94 = scmp.eq.s32.totalorder %s14, 1
      %p95 = scmp.ne.s32.totalorder %s90, %s92
      %p96 = scmp.eq.s32.totalorder %s14, 0
      %p97 = por %p95, %p96
      %p98 = scmp.ne.s32.totalorder %s90, %s92
      %p99 = scmp.eq.s32.totalorder %s19, 1
      %p100 = por %p98, %p99
      %p101 = scmp.ne.s32.totalorder %s92, %s93
      %p102 = scmp.eq.s32.totalorder %s19, 0
      %p103 = por %p101, %p102
      %p104 = scmp.ne.s32.totalorder %s92, %s93
      %p105 = scmp.eq.s32.totalorder %s20, 1
      %p106 = por %p104, %p105
      %p108 = scmp.ne.s32.totalorder %s93, %s107
      %p109 = scmp.eq.s32.totalorder %s20, 0
      %p110 = por %p108, %p109
      %s112 = sadd.s32 %s111, 1
      %p115 = scmp.eq.s32.totalorder %s14, 1
      %p116 = scmp.ne.s32.totalorder %s111, %s113
      %p117 = scmp.eq.s32.totalorder %s14, 0
      %p118 = por %p116, %p117
      %p119 = scmp.ne.s32.totalorder %s111, %s113
      %p120 = scmp.eq.s32.totalorder %s19, 1
      %p121 = por %p119, %p120
      %p122 = scmp.ne.s32.totalorder %s113, %s114
      %p123 = scmp.eq.s32.totalorder %s19, 0
      %p124 = por %p122, %p123
      %p125 = scmp.ne.s32.totalorder %s113, %s114
      %p126 = scmp.eq.s32.totalorder %s20, 1
      %p127 = por %p125, %p126
      %p129 = scmp.ne.s32.totalorder %s114, %s128
      %p130 = scmp.eq.s32.totalorder %s20, 0
      %p131 = por %p129, %p130
      %s132 = ssub.s32 %s14, %s21
      %p133 = scmp.eq.s32.totalorder %s132, 0
      %s135 = sadd.s32 %s134, 1
      %s136 = scalar_select %p133, %s134, %s135
      %p139 = pneg %p133
      %p140 = scmp.eq.s32.totalorder %s14, 1
      %p141 = por %p139, %p140
      %p142 = scmp.ne.s32.totalorder %s134, %s137
      %p143 = scmp.eq.s32.totalorder %s14, 0
      %p144 = por %p142, %p143
      %p145 = scmp.ne.s32.totalorder %s134, %s137
      %p146 = scmp.eq.s32.totalorder %s19, 1
      %p147 = por %p145, %p146
      %p148 = scmp.ne.s32.totalorder %s137, %s138
      %p149 = scmp.eq.s32.totalorder %s19, 0
      %p150 = por %p148, %p149
      %p151 = scmp.ne.s32.totalorder %s137, %s138
      %p152 = scmp.eq.s32.totalorder %s20, 1
      %p153 = por %p151, %p152
      %p155 = scmp.ne.s32.totalorder %s138, %s154
      %p156 = scmp.eq.s32.totalorder %s20, 0
      %p157 = por %p155, %p156
      %p158 = scmp.le.s32.totalorder 1, %s14
      %p159 = scmp.lt.s32.totalorder %s14, 3
      %p160 = pnand %p158, %p159
      %p161 = pneg %p160
      // Predicated region
      $region9: #{tpu_custom_call.1} parent=5 // pred_check
        _
      $region10: #{tpu_custom_call.1} parent=5 // pred_check_branch
        %163 = sbr.rel (%p160) target = $region12
      $region11: #{tpu_custom_call.1} parent=5 // pred_region
        %s164 = ssub.s32 %s14, 1
        // Predicated region
        $region13: #{tpu_custom_call.1} parent=11 // pred_check
          %p165 = pneg %p61
        $region14: #{tpu_custom_call.1} parent=11 // pred_check_branch
          %167 = sbr.rel (%p165) target = $region16
        $region15: #{tpu_custom_call.1} parent=11 // pred_region
          _
        $region16: #{tpu_custom_call.1} parent=11 // pred_fallthru
          _
        // Predicated region
        $region17: #{tpu_custom_call.1} parent=11 // pred_check
          %p168 = pneg %p82
        $region18: #{tpu_custom_call.1} parent=11 // pred_check_branch
          %170 = sbr.rel (%p168) target = $region20
        $region19: #{tpu_custom_call.1} parent=11 // pred_region
          _
        $region20: #{tpu_custom_call.1} parent=11 // pred_fallthru
          _
        // Predicated region
        $region21: #{tpu_custom_call.1} parent=11 // pred_check
          %p171 = pneg %p103
        $region22: #{tpu_custom_call.1} parent=11 // pred_check_branch
          %173 = sbr.rel (%p171) target = $region24
        $region23: #{tpu_custom_call.1} parent=11 // pred_region
          _
        $region24: #{tpu_custom_call.1} parent=11 // pred_fallthru
          _
        // Predicated region
        $region25: #{tpu_custom_call.1} parent=11 // pred_check
          %p174 = pneg %p124
        $region26: #{tpu_custom_call.1} parent=11 // pred_check_branch
          %176 = sbr.rel (%p174) target = $region28
        $region27: #{tpu_custom_call.1} parent=11 // pred_region
          _
        $region28: #{tpu_custom_call.1} parent=11 // pred_fallthru
          _
      $region12: #{tpu_custom_call.1} parent=5 // pred_fallthru
        _
      %p177 = scmp.lt.s32.totalorder %s14, 2
      // Predicated region
      $region29: #{tpu_custom_call.1} parent=5 // pred_check
        %p178 = pneg %p177
      $region30: #{tpu_custom_call.1} parent=5 // pred_check_branch
        %180 = sbr.rel (%p178) target = $region32
      $region31: #{tpu_custom_call.1} parent=5 // pred_region
        // Predicated region
        $region33: #{tpu_custom_call.1} parent=31 // pred_check
          %p181 = pneg %p34
        $region34: #{tpu_custom_call.1} parent=31 // pred_check_branch
          %183 = sbr.rel (%p181) target = $region36
        $region35: #{tpu_custom_call.1} parent=31 // pred_region
          %p184 = scmp.lt.s32.totalorder %s14, 1
          %s185 = scalar_select %p184, %s14, 1
          %s186 = smul.addr %s185, 54
          %s187 = smul.addr %s186, 8
          %s188 = scalar_lea.vmem %s0, %s187
        $region36: #{tpu_custom_call.1} parent=31 // pred_fallthru
          _
      $region32: #{tpu_custom_call.1} parent=5 // pred_fallthru
        _
      %p189 = scmp.le.s32.totalorder 1, %s14
      %p190 = scmp.lt.s32.totalorder %s14, 3
      %p191 = pnand %p189, %p190
      %p192 = pneg %p191
      // Predicated region
      $region37: #{tpu_custom_call.1} parent=5 // pred_check
        _
      $region38: #{tpu_custom_call.1} parent=5 // pred_check_branch
        %194 = sbr.rel (%p191) target = $region40
      $region39: #{tpu_custom_call.1} parent=5 // pred_region
        %s195 = ssub.s32 %s14, 1
        %p196 = scmp.lt.s32.totalorder %s19, 1
        %s197 = scalar_select %p196, %s19, 1
        %s198 = smul.addr %s197, 54
        %s199 = smul.addr %s198, 8
        %s200 = scalar_lea.vmem %s0, %s199
        %p201 = pneg %p40
        %p202 = pneg %p37
        %p203 = pneg %p61
        %p204 = pneg %p58
        %p205 = pneg %p82
        %p206 = pneg %p79
        %p207 = pneg %p103
        %p208 = pneg %p100
        %p209 = pneg %p124
        %p210 = pneg %p121
        %p211 = pneg %p150
        %p212 = pneg %p147
        %s213 = sand.u32 %s137, 1
        %s214 = scalar_lea.sflag [#allocation3], %s213
        %s215 = sand.u32 %s137, 1
        %s216 = scalar_lea.vmem [#allocation2], %s215
        %p217 = scmp.lt.s32.totalorder %s19, 1
        %s218 = scalar_select %p217, %s19, 1
        %s219 = smul.addr %s218, 54
        %s220 = smul.addr %s219, 8
        %s221 = scalar_lea.vmem %s0, %s220
        %v223 = vld [vmem:[%s221] sm:$0xff]
        %v224 = vld [vmem:[%s221 + $0x8] sm:$0xff]
        %v225 = vld [vmem:[%s221 + $0x18] sm:$0xff]
        %v226 = vld [vmem:[%s221 + $0x20] sm:$0xff]
        %v227 = vld [vmem:[%s221 + $0x30] sm:$0xff]
        %v228 = vld [vmem:[%s221 + $0x38] sm:$0xff]
        %v229 = vld [vmem:[%s221 + $0x48] sm:$0xff]
        %v230 = vld [vmem:[%s221 + $0x50] sm:$0xff]
        %v231 = vld [vmem:[%s221 + $0x60] sm:$0xff]
        %v232 = vld [vmem:[%s221 + $0x68] sm:$0xff]
        %v233 = vld [vmem:[%s221 + $0x78] sm:$0xff]
        %v234 = vld [vmem:[%s221 + $0x80] sm:$0xff]
        %v235 = vld [vmem:[%s221 + $0x90] sm:$0xff]
        %v236 = vld [vmem:[%s221 + $0x98] sm:$0xff]
        %v237 = vld [vmem:[%s221 + $0xa8] sm:$0xff]
        %v238 = vld [vmem:[%s221 + $0xb0] sm:$0xff]
        %v239 = vld [vmem:[%s221 + $0xc0] sm:$0xff]
        %v240 = vld [vmem:[%s221 + $0xc8] sm:$0xff]
        %v241 = vld [vmem:[%s221 + $0xd8] sm:$0xff]
        %v242 = vld [vmem:[%s221 + $0xe0] sm:$0xff]
        %v243 = vld [vmem:[%s221 + $0xf0] sm:$0xff]
        %v244 = vld [vmem:[%s221 + $0xf8] sm:$0xff]
        %v245 = vld [vmem:[%s221 + $0x108] sm:$0xff]
        %v246 = vld [vmem:[%s221 + $0x110] sm:$0xff]
        %v247 = vld [vmem:[%s221 + $0x120] sm:$0xff]
        %v248 = vld [vmem:[%s221 + $0x128] sm:$0xff]
        %v249 = vld [vmem:[%s221 + $0x138] sm:$0xff]
        %v250 = vld [vmem:[%s221 + $0x140] sm:$0xff]
        %v251 = vld [vmem:[%s221 + $0x150] sm:$0xff]
        %v252 = vld [vmem:[%s221 + $0x158] sm:$0xff]
        %v253 = vld [vmem:[%s221 + $0x168] sm:$0xff]
        %v254 = vld [vmem:[%s221 + $0x170] sm:$0xff]
        %v255 = vpack.c.bf16 %v224, %v223
        %v256 = vpack.c.bf16 %v226, %v225
        %v257 = vpack.c.bf16 %v228, %v227
        %v258 = vpack.c.bf16 %v230, %v229
        %v259 = vpack.c.bf16 %v232, %v231
        %v260 = vpack.c.bf16 %v234, %v233
        %v261 = vpack.c.bf16 %v236, %v235
        %v262 = vpack.c.bf16 %v238, %v237
        %v263 = vpack.c.bf16 %v240, %v239
        %v264 = vpack.c.bf16 %v242, %v241
        %v265 = vpack.c.bf16 %v244, %v243
        %v266 = vpack.c.bf16 %v246, %v245
        %v267 = vpack.c.bf16 %v248, %v247
        %v268 = vpack.c.bf16 %v250, %v249
        %v269 = vpack.c.bf16 %v252, %v251
        %v270 = vpack.c.bf16 %v254, %v253
        %v271 = vld [vmem:[%s1] sm:$0x3]
        %v272 = vld [vmem:[%s221 + $0x1] sm:$0xff]
        %v273 = vld [vmem:[%s221 + $0x9] sm:$0xff]
        %v274 = vld [vmem:[%s221 + $0x19] sm:$0xff]
        %v275 = vld [vmem:[%s221 + $0x21] sm:$0xff]
        %v276 = vld [vmem:[%s221 + $0x31] sm:$0xff]
        %v277 = vld [vmem:[%s221 + $0x39] sm:$0xff]
        %v278 = vld [vmem:[%s221 + $0x49] sm:$0xff]
        %v279 = vld [vmem:[%s221 + $0x51] sm:$0xff]
        %v280 = vld [vmem:[%s221 + $0x61] sm:$0xff]
        %v281 = vld [vmem:[%s221 + $0x69] sm:$0xff]
        %v282 = vld [vmem:[%s221 + $0x79] sm:$0xff]
        %v283 = vld [vmem:[%s221 + $0x81] sm:$0xff]
        %v284 = vld [vmem:[%s221 + $0x91] sm:$0xff]
        %v285 = vld [vmem:[%s221 + $0x99] sm:$0xff]
        %v286 = vld [vmem:[%s221 + $0xa9] sm:$0xff]
        %v287 = vld [vmem:[%s221 + $0xb1] sm:$0xff]
        %v288 = vld [vmem:[%s221 + $0xc1] sm:$0xff]
        %v289 = vld [vmem:[%s221 + $0xc9] sm:$0xff]
        %v290 = vld [vmem:[%s221 + $0xd9] sm:$0xff]
        %v291 = vld [vmem:[%s221 + $0xe1] sm:$0xff]
        %v292 = vld [vmem:[%s221 + $0xf1] sm:$0xff]
        %v293 = vld [vmem:[%s221 + $0xf9] sm:$0xff]
        %v294 = vld [vmem:[%s221 + $0x109] sm:$0xff]
        %v295 = vld [vmem:[%s221 + $0x111] sm:$0xff]
        %v296 = vld [vmem:[%s221 + $0x121] sm:$0xff]
        %v297 = vld [vmem:[%s221 + $0x129] sm:$0xff]
        %v298 = vld [vmem:[%s221 + $0x139] sm:$0xff]
        %v299 = vld [vmem:[%s221 + $0x141] sm:$0xff]
        %v300 = vld [vmem:[%s221 + $0x151] sm:$0xff]
        %v301 = vld [vmem:[%s221 + $0x159] sm:$0xff]
        %v302 = vld [vmem:[%s221 + $0x169] sm:$0xff]
        %v303 = vld [vmem:[%s221 + $0x171] sm:$0xff]
        %v304 = vpack.c.bf16 %v273, %v272
        %v305 = vpack.c.bf16 %v275, %v274
        %v306 = vpack.c.bf16 %v277, %v276
        %v307 = vpack.c.bf16 %v279, %v278
        %v308 = vpack.c.bf16 %v281, %v280
        %v309 = vpack.c.bf16 %v283, %v282
        %v310 = vpack.c.bf16 %v285, %v284
        %v311 = vpack.c.bf16 %v287, %v286
        %v312 = vpack.c.bf16 %v289, %v288
        %v313 = vpack.c.bf16 %v291, %v290
        %v314 = vpack.c.bf16 %v293, %v292
        %v315 = vpack.c.bf16 %v295, %v294
        %v316 = vpack.c.bf16 %v297, %v296
        %v317 = vpack.c.bf16 %v299, %v298
        %v318 = vpack.c.bf16 %v301, %v300
        %v319 = vpack.c.bf16 %v303, %v302
        %s320 = scalar_lea.vmem %s1, 2
        %v321 = vld [vmem:[%s320] sm:$0x3]
        %vm322 = vcmask 31744
        %v324 = vsel %vm322, %v304, 0
        %v327 = vsel %vm322, %v305, 0
        %v330 = vsel %vm322, %v306, 0
        %v333 = vsel %vm322, %v307, 0
        %v336 = vsel %vm322, %v308, 0
        %v339 = vsel %vm322, %v309, 0
        %v342 = vsel %vm322, %v310, 0
        %v345 = vsel %vm322, %v311, 0
        %v348 = vsel %vm322, %v312, 0
        %v351 = vsel %vm322, %v313, 0
        %v354 = vsel %vm322, %v314, 0
        %v357 = vsel %vm322, %v315, 0
        %v360 = vsel %vm322, %v316, 0
        %v363 = vsel %vm322, %v317, 0
        %v366 = vsel %vm322, %v318, 0
        %v369 = vsel %vm322, %v319, 0
        %vm371 = vcmask 1041408
        %v373 = vsel %vm371, %v321, 0
        %375 = vmatprep.subr.bf16.mxu0 0
        %376 = vmatpush1.bf16.msra.mxu0 %v373
        %377 = vmatprep.subr.bf16.mxu0 0
        %378 = vmatpush1.bf16.msra.mxu0 0
        %379 = vmatprep.subr.bf16.mxu0 0
        %380 = vmatpush1.bf16.msra.mxu0 0
        %381 = vmatprep.subr.bf16.mxu0 0
        %382 = vmatpush1.bf16.msra.mxu0 0
        %383 = vmatprep.subr.bf16.mxu0 0
        %384 = vmatpush1.bf16.msra.mxu0 0
        %385 = vmatprep.subr.bf16.mxu0 0
        %386 = vmatpush1.bf16.msra.mxu0 0
        %387 = vmatprep.subr.bf16.mxu0 0
        %388 = vmatpush1.bf16.msra.mxu0 0
        %389 = vmatprep.subr.bf16.mxu0 0
        %390 = vmatpush1.bf16.msra.mxu0 0
        %391 = vmatprep.subr.bf16.mxu0 0
        %392 = vmatpush1.bf16.msra.mxu0 0
        %393 = vmatprep.subr.bf16.mxu0 0
        %394 = vmatpush1.bf16.msra.mxu0 0
        %395 = vmatprep.subr.bf16.mxu0 0
        %396 = vmatpush1.bf16.msra.mxu0 0
        %397 = vmatprep.subr.bf16.mxu0 0
        %398 = vmatpush1.bf16.msra.mxu0 0
        %399 = vmatprep.subr.bf16.mxu0 0
        %400 = vmatpush1.bf16.msra.mxu0 0
        %401 = vmatprep.subr.bf16.mxu0 0
        %402 = vmatpush1.bf16.msra.mxu0 0
        %403 = vmatprep.subr.bf16.mxu0 0
        %404 = vmatpush1.bf16.msra.mxu0 0
        %405 = vmatprep.subr.bf16.mxu0 0
        %406 = vmatpush1.bf16.msra.mxu0 0
        %407 = vmatprep.mubr.bf16.mxu0 0
        %408 = vmatmul.mubr.bf16.gmra.mrb[0].mxu0 %v324
        %v409 = vpop.f32.mrb[0].mxu0
        %v410 = vadd.f32 0.0, %v409
        %v411 = vpop.f32.mrb[0].mxu0
        %v412 = vpop.f32.mrb[0].mxu0
        %v413 = vadd.f32 0.0, %v412
        %v414 = vpop.f32.mrb[0].mxu0
        %415 = vmatprep.mubr.bf16.mxu0 0
        %416 = vmatmul.mubr.bf16.gmra.mrb[0].mxu0 %v327
        %v417 = vpop.f32.mrb[0].mxu0
        %v418 = vadd.f32 0.0, %v417
        %v419 = vpop.f32.mrb[0].mxu0
        %v420 = vpop.f32.mrb[0].mxu0
        %v421 = vadd.f32 0.0, %v420
        %v422 = vpop.f32.mrb[0].mxu0
        %423 = vmatprep.mubr.bf16.mxu0 0
        %424 = vmatmul.mubr.bf16.gmra.mrb[0].mxu0 %v330
        %v425 = vpop.f32.mrb[0].mxu0
        %v426 = vadd.f32 0.0, %v425
        %v427 = vpop.f32.mrb[0].mxu0
        %v428 = vpop.f32.mrb[0].mxu0
        %v429 = vadd.f32 0.0, %v428
        %v430 = vpop.f32.mrb[0].mxu0
        %431 = vmatprep.mubr.bf16.mxu0 0
        %432 = vmatmul.mubr.bf16.gmra.mrb[0].mxu0 %v333
        %v433 = vpop.f32.mrb[0].mxu0
        %v434 = vadd.f32 0.0, %v433
        %v435 = vpop.f32.mrb[0].mxu0
        %v436 = vpop.f32.mrb[0].mxu0
        %v437 = vadd.f32 0.0, %v436
        %v438 = vpop.f32.mrb[0].mxu0
        %439 = vmatprep.mubr.bf16.mxu0 0
        %440 = vmatmul.mubr.bf16.gmra.mrb[0].mxu0 %v336
        %v441 = vpop.f32.mrb[0].mxu0
        %v442 = vadd.f32 0.0, %v441
        %v443 = vpop.f32.mrb[0].mxu0
        %v444 = vpop.f32.mrb[0].mxu0
        %v445 = vadd.f32 0.0, %v444
        %v446 = vpop.f32.mrb[0].mxu0
        %447 = vmatprep.mubr.bf16.mxu0 0
        %448 = vmatmul.mubr.bf16.gmra.mrb[0].mxu0 %v339
        %v449 = vpop.f32.mrb[0].mxu0
        %v450 = vadd.f32 0.0, %v449
        %v451 = vpop.f32.mrb[0].mxu0
        %v452 = vpop.f32.mrb[0].mxu0
        %v453 = vadd.f32 0.0, %v452
        %v454 = vpop.f32.mrb[0].mxu0
        %455 = vmatprep.mubr.bf16.mxu0 0
        %456 = vmatmul.mubr.bf16.gmra.mrb[0].mxu0 %v342
        %v457 = vpop.f32.mrb[0].mxu0
        %v458 = vadd.f32 0.0, %v457
        %v459 = vpop.f32.mrb[0].mxu0
        %v460 = vpop.f32.mrb[0].mxu0
        %v461 = vadd.f32 0.0, %v460
        %v462 = vpop.f32.mrb[0].mxu0
        %463 = vmatprep.mubr.bf16.mxu0 0
        %464 = vmatmul.mubr.bf16.gmra.mrb[0].mxu0 %v345
        %v465 = vpop.f32.mrb[0].mxu0
        %v466 = vadd.f32 0.0, %v465
        %v467 = vpop.f32.mrb[0].mxu0
        %v468 = vpop.f32.mrb[0].mxu0
        %v469 = vadd.f32 0.0, %v468
        %v470 = vpop.f32.mrb[0].mxu0
        %471 = vmatprep.mubr.bf16.mxu0 0
        %472 = vmatmul.mubr.bf16.gmra.mrb[0].mxu0 %v348
        %v473 = vpop.f32.mrb[0].mxu0
        %v474 = vadd.f32 0.0, %v473
        %v475 = vpop.f32.mrb[0].mxu0
        %v476 = vpop.f32.mrb[0].mxu0
        %v477 = vadd.f32 0.0, %v476
        %v478 = vpop.f32.mrb[0].mxu0
        %479 = vmatprep.mubr.bf16.mxu0 0
        %480 = vmatmul.mubr.bf16.gmra.mrb[0].mxu0 %v351
        %v481 = vpop.f32.mrb[0].mxu0
        %v482 = vadd.f32 0.0, %v481
        %v483 = vpop.f32.mrb[0].mxu0
        %v484 = vpop.f32.mrb[0].mxu0
        %v485 = vadd.f32 0.0, %v484
        %v486 = vpop.f32.mrb[0].mxu0
        %487 = vmatprep.mubr.bf16.mxu0 0
        %488 = vmatmul.mubr.bf16.gmra.mrb[0].mxu0 %v354
        %v489 = vpop.f32.mrb[0].mxu0
        %v490 = vadd.f32 0.0, %v489
        %v491 = vpop.f32.mrb[0].mxu0
        %v492 = vpop.f32.mrb[0].mxu0
        %v493 = vadd.f32 0.0, %v492
        %v494 = vpop.f32.mrb[0].mxu0
        %495 = vmatprep.mubr.bf16.mxu0 0
        %496 = vmatmul.mubr.bf16.gmra.mrb[0].mxu0 %v357
        %v497 = vpop.f32.mrb[0].mxu0
        %v498 = vadd.f32 0.0, %v497
        %v499 = vpop.f32.mrb[0].mxu0
        %v500 = vpop.f32.mrb[0].mxu0
        %v501 = vadd.f32 0.0, %v500
        %v502 = vpop.f32.mrb[0].mxu0
        %503 = vmatprep.mubr.bf16.mxu0 0
        %504 = vmatmul.mubr.bf16.gmra.mrb[0].mxu0 %v360
        %v505 = vpop.f32.mrb[0].mxu0
        %v506 = vadd.f32 0.0, %v505
        %v507 = vpop.f32.mrb[0].mxu0
        %v508 = vpop.f32.mrb[0].mxu0
        %v509 = vadd.f32 0.0, %v508
        %v510 = vpop.f32.mrb[0].mxu0
        %511 = vmatprep.mubr.bf16.mxu0 0
        %512 = vmatmul.mubr.bf16.gmra.mrb[0].mxu0 %v363
        %v513 = vpop.f32.mrb[0].mxu0
        %v514 = vadd.f32 0.0, %v513
        %v515 = vpop.f32.mrb[0].mxu0
        %v516 = vpop.f32.mrb[0].mxu0
        %v517 = vadd.f32 0.0, %v516
        %v518 = vpop.f32.mrb[0].mxu0
        %519 = vmatprep.mubr.bf16.mxu0 0
        %520 = vmatmul.mubr.bf16.gmra.mrb[0].mxu0 %v366
        %v521 = vpop.f32.mrb[0].mxu0
        %v522 = vadd.f32 0.0, %v521
        %v523 = vpop.f32.mrb[0].mxu0
        %v524 = vpop.f32.mrb[0].mxu0
        %v525 = vadd.f32 0.0, %v524
        %v526 = vpop.f32.mrb[0].mxu0
        %527 = vmatprep.mubr.bf16.mxu0 0
        %528 = vmatmul.mubr.bf16.gmra.mrb[0].mxu0 %v369
        %v529 = vpop.f32.mrb[0].mxu0
        %v530 = vadd.f32 0.0, %v529
        %v531 = vpop.f32.mrb[0].mxu0
        %v532 = vpop.f32.mrb[0].mxu0
        %v533 = vadd.f32 0.0, %v532
        %v534 = vpop.f32.mrb[0].mxu0
        %535 = vdwg.mxu0
        %v537 = vsel %vm322, %v255, 0
        %v540 = vsel %vm322, %v256, 0
        %v543 = vsel %vm322, %v257, 0
        %v546 = vsel %vm322, %v258, 0
        %v549 = vsel %vm322, %v259, 0
        %v552 = vsel %vm322, %v260, 0
        %v555 = vsel %vm322, %v261, 0
        %v558 = vsel %vm322, %v262, 0
        %v561 = vsel %vm322, %v263, 0
        %v564 = vsel %vm322, %v264, 0
        %v567 = vsel %vm322, %v265, 0
        %v570 = vsel %vm322, %v266, 0
        %v573 = vsel %vm322, %v267, 0
        %v576 = vsel %vm322, %v268, 0
        %v579 = vsel %vm322, %v269, 0
        %v582 = vsel %vm322, %v270, 0
        %v585 = vsel %vm371, %v271, 0
        %587 = vmatprep.subr.bf16.mxu0 0
        %588 = vmatpush1.bf16.msra.mxu0 %v585
        %589 = vmatprep.subr.bf16.mxu0 0
        %590 = vmatpush1.bf16.msra.mxu0 0
        %591 = vmatprep.subr.bf16.mxu0 0
        %592 = vmatpush1.bf16.msra.mxu0 0
        %593 = vmatprep.subr.bf16.mxu0 0
        %594 = vmatpush1.bf16.msra.mxu0 0
        %595 = vmatprep.subr.bf16.mxu0 0
        %596 = vmatpush1.bf16.msra.mxu0 0
        %597 = vmatprep.subr.bf16.mxu0 0
        %598 = vmatpush1.bf16.msra.mxu0 0
        %599 = vmatprep.subr.bf16.mxu0 0
        %600 = vmatpush1.bf16.msra.mxu0 0
        %601 = vmatprep.subr.bf16.mxu0 0
        %602 = vmatpush1.bf16.msra.mxu0 0
        %603 = vmatprep.subr.bf16.mxu0 0
        %604 = vmatpush1.bf16.msra.mxu0 0
        %605 = vmatprep.subr.bf16.mxu0 0
        %606 = vmatpush1.bf16.msra.mxu0 0
        %607 = vmatprep.subr.bf16.mxu0 0
        %608 = vmatpush1.bf16.msra.mxu0 0
        %609 = vmatprep.subr.bf16.mxu0 0
        %610 = vmatpush1.bf16.msra.mxu0 0
        %611 = vmatprep.subr.bf16.mxu0 0
        %612 = vmatpush1.bf16.msra.mxu0 0
        %613 = vmatprep.subr.bf16.mxu0 0
        %614 = vmatpush1.bf16.msra.mxu0 0
        %615 = vmatprep.subr.bf16.mxu0 0
        %616 = vmatpush1.bf16.msra.mxu0 0
        %617 = vmatprep.subr.bf16.mxu0 0
        %618 = vmatpush1.bf16.msra.mxu0 0
        %619 = vmatprep.mubr.bf16.mxu0 0
        %620 = vmatmul.mubr.bf16.gmra.mrb[0].mxu0 %v537
        %v621 = vpop.f32.mrb[0].mxu0
        %v622 = vadd.f32 %v410, %v621
        %v623 = vpop.f32.mrb[0].mxu0
        %v624 = vpop.f32.mrb[0].mxu0
        %v625 = vadd.f32 %v413, %v624
        %v626 = vpop.f32.mrb[0].mxu0
        %627 = vmatprep.mubr.bf16.mxu0 0
        %628 = vmatmul.mubr.bf16.gmra.mrb[0].mxu0 %v540
        %v629 = vpop.f32.mrb[0].mxu0
        %v630 = vadd.f32 %v418, %v629
        %v631 = vpop.f32.mrb[0].mxu0
        %v632 = vpop.f32.mrb[0].mxu0
        %v633 = vadd.f32 %v421, %v632
        %v634 = vpop.f32.mrb[0].mxu0
        %635 = vmatprep.mubr.bf16.mxu0 0
        %636 = vmatmul.mubr.bf16.gmra.mrb[0].mxu0 %v543
        %v637 = vpop.f32.mrb[0].mxu0
        %v638 = vadd.f32 %v426, %v637
        %v639 = vpop.f32.mrb[0].mxu0
        %v640 = vpop.f32.mrb[0].mxu0
        %v641 = vadd.f32 %v429, %v640
        %v642 = vpop.f32.mrb[0].mxu0
        %643 = vmatprep.mubr.bf16.mxu0 0
        %644 = vmatmul.mubr.bf16.gmra.mrb[0].mxu0 %v546
        %v645 = vpop.f32.mrb[0].mxu0
        %v646 = vadd.f32 %v434, %v645
        %v647 = vpop.f32.mrb[0].mxu0
        %v648 = vpop.f32.mrb[0].mxu0
        %v649 = vadd.f32 %v437, %v648
        %v650 = vpop.f32.mrb[0].mxu0
        %651 = vmatprep.mubr.bf16.mxu0 0
        %652 = vmatmul.mubr.bf16.gmra.mrb[0].mxu0 %v549
        %v653 = vpop.f32.mrb[0].mxu0
        %v654 = vadd.f32 %v442, %v653
        %v655 = vpop.f32.mrb[0].mxu0
        %v656 = vpop.f32.mrb[0].mxu0
        %v657 = vadd.f32 %v445, %v656
        %v658 = vpop.f32.mrb[0].mxu0
        %659 = vmatprep.mubr.bf16.mxu0 0
        %660 = vmatmul.mubr.bf16.gmra.mrb[0].mxu0 %v552
        %v661 = vpop.f32.mrb[0].mxu0
        %v662 = vadd.f32 %v450, %v661
        %v663 = vpop.f32.mrb[0].mxu0
        %v664 = vpop.f32.mrb[0].mxu0
        %v665 = vadd.f32 %v453, %v664
        %v666 = vpop.f32.mrb[0].mxu0
        %667 = vmatprep.mubr.bf16.mxu0 0
        %668 = vmatmul.mubr.bf16.gmra.mrb[0].mxu0 %v555
        %v669 = vpop.f32.mrb[0].mxu0
        %v670 = vadd.f32 %v458, %v669
        %v671 = vpop.f32.mrb[0].mxu0
        %v672 = vpop.f32.mrb[0].mxu0
        %v673 = vadd.f32 %v461, %v672
        %v674 = vpop.f32.mrb[0].mxu0
        %675 = vmatprep.mubr.bf16.mxu0 0
        %676 = vmatmul.mubr.bf16.gmra.mrb[0].mxu0 %v558
        %v677 = vpop.f32.mrb[0].mxu0
        %v678 = vadd.f32 %v466, %v677
        %v679 = vpop.f32.mrb[0].mxu0
        %v680 = vpop.f32.mrb[0].mxu0
        %v681 = vadd.f32 %v469, %v680
        %v682 = vpop.f32.mrb[0].mxu0
        %683 = vmatprep.mubr.bf16.mxu0 0
        %684 = vmatmul.mubr.bf16.gmra.mrb[0].mxu0 %v561
        %v685 = vpop.f32.mrb[0].mxu0
        %v686 = vadd.f32 %v474, %v685
        %v687 = vpop.f32.mrb[0].mxu0
        %v688 = vpop.f32.mrb[0].mxu0
        %v689 = vadd.f32 %v477, %v688
        %v690 = vpop.f32.mrb[0].mxu0
        %691 = vmatprep.mubr.bf16.mxu0 0
        %692 = vmatmul.mubr.bf16.gmra.mrb[0].mxu0 %v564
        %v693 = vpop.f32.mrb[0].mxu0
        %v694 = vadd.f32 %v482, %v693
        %v695 = vpop.f32.mrb[0].mxu0
        %v696 = vpop.f32.mrb[0].mxu0
        %v697 = vadd.f32 %v485, %v696
        %v698 = vpop.f32.mrb[0].mxu0
        %699 = vmatprep.mubr.bf16.mxu0 0
        %700 = vmatmul.mubr.bf16.gmra.mrb[0].mxu0 %v567
        %v701 = vpop.f32.mrb[0].mxu0
        %v702 = vadd.f32 %v490, %v701
        %v703 = vpop.f32.mrb[0].mxu0
        %v704 = vpop.f32.mrb[0].mxu0
        %v705 = vadd.f32 %v493, %v704
        %v706 = vpop.f32.mrb[0].mxu0
        %707 = vmatprep.mubr.bf16.mxu0 0
        %708 = vmatmul.mubr.bf16.gmra.mrb[0].mxu0 %v570
        %v709 = vpop.f32.mrb[0].mxu0
        %v710 = vadd.f32 %v498, %v709
        %v711 = vpop.f32.mrb[0].mxu0
        %v712 = vpop.f32.mrb[0].mxu0
        %v713 = vadd.f32 %v501, %v712
        %v714 = vpop.f32.mrb[0].mxu0
        %715 = vmatprep.mubr.bf16.mxu0 0
        %716 = vmatmul.mubr.bf16.gmra.mrb[0].mxu0 %v573
        %v717 = vpop.f32.mrb[0].mxu0
        %v718 = vadd.f32 %v506, %v717
        %v719 = vpop.f32.mrb[0].mxu0
        %v720 = vpop.f32.mrb[0].mxu0
        %v721 = vadd.f32 %v509, %v720
        %v722 = vpop.f32.mrb[0].mxu0
        %723 = vmatprep.mubr.bf16.mxu0 0
        %724 = vmatmul.mubr.bf16.gmra.mrb[0].mxu0 %v576
        %v725 = vpop.f32.mrb[0].mxu0
        %v726 = vadd.f32 %v514, %v725
        %v727 = vpop.f32.mrb[0].mxu0
        %v728 = vpop.f32.mrb[0].mxu0
        %v729 = vadd.f32 %v517, %v728
        %v730 = vpop.f32.mrb[0].mxu0
        %731 = vmatprep.mubr.bf16.mxu0 0
        %732 = vmatmul.mubr.bf16.gmra.mrb[0].mxu0 %v579
        %v733 = vpop.f32.mrb[0].mxu0
        %v734 = vadd.f32 %v522, %v733
        %v735 = vpop.f32.mrb[0].mxu0
        %v736 = vpop.f32.mrb[0].mxu0
        %v737 = vadd.f32 %v525, %v736
        %v738 = vpop.f32.mrb[0].mxu0
        %739 = vmatprep.mubr.bf16.mxu0 0
        %740 = vmatmul.mubr.bf16.gmra.mrb[0].mxu0 %v582
        %v741 = vpop.f32.mrb[0].mxu0
        %v742 = vadd.f32 %v530, %v741
        %v743 = vpop.f32.mrb[0].mxu0
        %v744 = vpop.f32.mrb[0].mxu0
        %v745 = vadd.f32 %v533, %v744
        %v746 = vpop.f32.mrb[0].mxu0
        %747 = vdwg.mxu0
        %v748 = vld [vmem:[%s221 + $0x2] sm:$0xff]
        %v749 = vld [vmem:[%s221 + $0xa] sm:$0xff]
        %v750 = vld [vmem:[%s221 + $0x1a] sm:$0xff]
        %v751 = vld [vmem:[%s221 + $0x22] sm:$0xff]
        %v752 = vld [vmem:[%s221 + $0x32] sm:$0xff]
        %v753 = vld [vmem:[%s221 + $0x3a] sm:$0xff]
        %v754 = vld [vmem:[%s221 + $0x4a] sm:$0xff]
        %v755 = vld [vmem:[%s221 + $0x52] sm:$0xff]
        %v756 = vld [vmem:[%s221 + $0x62] sm:$0xff]
        %v757 = vld [vmem:[%s221 + $0x6a] sm:$0xff]
        %v758 = vld [vmem:[%s221 + $0x7a] sm:$0xff]
        %v759 = vld [vmem:[%s221 + $0x82] sm:$0xff]
        %v760 = vld [vmem:[%s221 + $0x92] sm:$0xff]
        %v761 = vld [vmem:[%s221 + $0x9a] sm:$0xff]
        %v762 = vld [vmem:[%s221 + $0xaa] sm:$0xff]
        %v763 = vld [vmem:[%s221 + $0xb2] sm:$0xff]
        %v764 = vld [vmem:[%s221 + $0xc2] sm:$0xff]
        %v765 = vld [vmem:[%s221 + $0xca] sm:$0xff]
        %v766 = vld [vmem:[%s221 + $0xda] sm:$0xff]
        %v767 = vld [vmem:[%s221 + $0xe2] sm:$0xff]
        %v768 = vld [vmem:[%s221 + $0xf2] sm:$0xff]
        %v769 = vld [vmem:[%s221 + $0xfa] sm:$0xff]
        %v770 = vld [vmem:[%s221 + $0x10a] sm:$0xff]
        %v771 = vld [vmem:[%s221 + $0x112] sm:$0xff]
        %v772 = vld [vmem:[%s221 + $0x122] sm:$0xff]
        %v773 = vld [vmem:[%s221 + $0x12a] sm:$0xff]
        %v774 = vld [vmem:[%s221 + $0x13a] sm:$0xff]
        %v775 = vld [vmem:[%s221 + $0x142] sm:$0xff]
        %v776 = vld [vmem:[%s221 + $0x152] sm:$0xff]
        %v777 = vld [vmem:[%s221 + $0x15a] sm:$0xff]
        %v778 = vld [vmem:[%s221 + $0x16a] sm:$0xff]
        %v779 = vld [vmem:[%s221 + $0x172] sm:$0xff]
        %v780 = vpack.c.bf16 %v749, %v748
        %v781 = vpack.c.bf16 %v751, %v750
        %v782 = vpack.c.bf16 %v753, %v752
        %v783 = vpack.c.bf16 %v755, %v754
        %v784 = vpack.c.bf16 %v757, %v756
        %v785 = vpack.c.bf16 %v759, %v758
        %v786 = vpack.c.bf16 %v761, %v760
        %v787 = vpack.c.bf16 %v763, %v762
        %v788 = vpack.c.bf16 %v765, %v764
        %v789 = vpack.c.bf16 %v767, %v766
        %v790 = vpack.c.bf16 %v769, %v768
        %v791 = vpack.c.bf16 %v771, %v770
        %v792 = vpack.c.bf16 %v773, %v772
        %v793 = vpack.c.bf16 %v775, %v774
        %v794 = vpack.c.bf16 %v777, %v776
        %v795 = vpack.c.bf16 %v779, %v778
        %s796 = scalar_lea.vmem %s1, 4
        %v797 = vld [vmem:[%s796] sm:$0x3]
        %v799 = vsel %vm322, %v780, 0
        %v802 = vsel %vm322, %v781, 0
        %v805 = vsel %vm322, %v782, 0
        %v808 = vsel %vm322, %v783, 0
        %v811 = vsel %vm322, %v784, 0
        %v814 = vsel %vm322, %v785, 0
        %v817 = vsel %vm322, %v786, 0
        %v820 = vsel %vm322, %v787, 0
        %v823 = vsel %vm322, %v788, 0
        %v826 = vsel %vm322, %v789, 0
        %v829 = vsel %vm322, %v790, 0
        %v832 = vsel %vm322, %v791, 0
        %v835 = vsel %vm322, %v792, 0
        %v838 = vsel %vm322, %v793, 0
        %v841 = vsel %vm322, %v794, 0
        %v844 = vsel %vm322, %v795, 0
        %v847 = vsel %vm371, %v797, 0
        %849 = vmatprep.subr.bf16.mxu0 0
        %850 = vmatpush1.bf16.msra.mxu0 %v847
        %851 = vmatprep.subr.bf16.mxu0 0
        %852 = vmatpush1.bf16.msra.mxu0 0
        %853 = vmatprep.subr.bf16.mxu0 0
        %854 = vmatpush1.bf16.msra.mxu0 0
        %855 = vmatprep.subr.bf16.mxu0 0
        %856 = vmatpush1.bf16.msra.mxu0 0
        %857 = vmatprep.subr.bf16.mxu0 0
        %858 = vmatpush1.bf16.msra.mxu0 0
        %859 = vmatprep.subr.bf16.mxu0 0
        %860 = vmatpush1.bf16.msra.mxu0 0
        %861 = vmatprep.subr.bf16.mxu0 0
        %862 = vmatpush1.bf16.msra.mxu0 0
        %863 = vmatprep.subr.bf16.mxu0 0
        %864 = vmatpush1.bf16.msra.mxu0 0
        %865 = vmatprep.subr.bf16.mxu0 0
        %866 = vmatpush1.bf16.msra.mxu0 0
        %867 = vmatprep.subr.bf16.mxu0 0
        %868 = vmatpush1.bf16.msra.mxu0 0
        %869 = vmatprep.subr.bf16.mxu0 0
        %870 = vmatpush1.bf16.msra.mxu0 0
        %871 = vmatprep.subr.bf16.mxu0 0
        %872 = vmatpush1.bf16.msra.mxu0 0
        %873 = vmatprep.subr.bf16.mxu0 0
        %874 = vmatpush1.bf16.msra.mxu0 0
        %875 = vmatprep.subr.bf16.mxu0 0
        %876 = vmatpush1.bf16.msra.mxu0 0
        %877 = vmatprep.subr.bf16.mxu0 0
        %878 = vmatpush1.bf16.msra.mxu0 0
        %879 = vmatprep.subr.bf16.mxu0 0
        %880 = vmatpush1.bf16.msra.mxu0 0
        %881 = vmatprep.mubr.bf16.mxu0 0
        %882 = vmatmul.mubr.bf16.gmra.mrb[0].mxu0 %v799
        %v883 = vpop.f32.mrb[0].mxu0
        %v884 = vadd.f32 0.0, %v883
        %v885 = vpop.f32.mrb[0].mxu0
        %v886 = vpop.f32.mrb[0].mxu0
        %v887 = vadd.f32 0.0, %v886
        %v888 = vpop.f32.mrb[0].mxu0
        %889 = vmatprep.mubr.bf16.mxu0 0
        %890 = vmatmul.mubr.bf16.gmra.mrb[0].mxu0 %v802
        %v891 = vpop.f32.mrb[0].mxu0
        %v892 = vadd.f32 0.0, %v891
        %v893 = vpop.f32.mrb[0].mxu0
        %v894 = vpop.f32.mrb[0].mxu0
        %v895 = vadd.f32 0.0, %v894
        %v896 = vpop.f32.mrb[0].mxu0
        %897 = vmatprep.mubr.bf16.mxu0 0
        %898 = vmatmul.mubr.bf16.gmra.mrb[0].mxu0 %v805
        %v899 = vpop.f32.mrb[0].mxu0
        %v900 = vadd.f32 0.0, %v899
        %v901 = vpop.f32.mrb[0].mxu0
        %v902 = vpop.f32.mrb[0].mxu0
        %v903 = vadd.f32 0.0, %v902
        %v904 = vpop.f32.mrb[0].mxu0
        %905 = vmatprep.mubr.bf16.mxu0 0
        %906 = vmatmul.mubr.bf16.gmra.mrb[0].mxu0 %v808
        %v907 = vpop.f32.mrb[0].mxu0
        %v908 = vadd.f32 0.0, %v907
        %v909 = vpop.f32.mrb[0].mxu0
        %v910 = vpop.f32.mrb[0].mxu0
        %v911 = vadd.f32 0.0, %v910
        %v912 = vpop.f32.mrb[0].mxu0
        %913 = vmatprep.mubr.bf16.mxu0 0
        %914 = vmatmul.mubr.bf16.gmra.mrb[0].mxu0 %v811
        %v915 = vpop.f32.mrb[0].mxu0
        %v916 = vadd.f32 0.0, %v915
        %v917 = vpop.f32.mrb[0].mxu0
        %v918 = vpop.f32.mrb[0].mxu0
        %v919 = vadd.f32 0.0, %v918
        %v920 = vpop.f32.mrb[0].mxu0
        %921 = vmatprep.mubr.bf16.mxu0 0
        %922 = vmatmul.mubr.bf16.gmra.mrb[0].mxu0 %v814
        %v923 = vpop.f32.mrb[0].mxu0
        %v924 = vadd.f32 0.0, %v923
        %v925 = vpop.f32.mrb[0].mxu0
        %v926 = vpop.f32.mrb[0].mxu0
        %v927 = vadd.f32 0.0, %v926
        %v928 = vpop.f32.mrb[0].mxu0
        %929 = vmatprep.mubr.bf16.mxu0 0
        %930 = vmatmul.mubr.bf16.gmra.mrb[0].mxu0 %v817
        %v931 = vpop.f32.mrb[0].mxu0
        %v932 = vadd.f32 0.0, %v931
        %v933 = vpop.f32.mrb[0].mxu0
        %v934 = vpop.f32.mrb[0].mxu0
        %v935 = vadd.f32 0.0, %v934
        %v936 = vpop.f32.mrb[0].mxu0
        %937 = vmatprep.mubr.bf16.mxu0 0
        %938 = vmatmul.mubr.bf16.gmra.mrb[0].mxu0 %v820
        %v939 = vpop.f32.mrb[0].mxu0
        %v940 = vadd.f32 0.0, %v939
        %v941 = vpop.f32.mrb[0].mxu0
        %v942 = vpop.f32.mrb[0].mxu0
        %v943 = vadd.f32 0.0, %v942
        %v944 = vpop.f32.mrb[0].mxu0
        %945 = vmatprep.mubr.bf16.mxu0 0
        %946 = vmatmul.mubr.bf16.gmra.mrb[0].mxu0 %v823
        %v947 = vpop.f32.mrb[0].mxu0
        %v948 = vadd.f32 0.0, %v947
        %v949 = vpop.f32.mrb[0].mxu0
        %v950 = vpop.f32.mrb[0].mxu0
        %v951 = vadd.f32 0.0, %v950
        %v952 = vpop.f32.mrb[0].mxu0
        %953 = vmatprep.mubr.bf16.mxu0 0
        %954 = vmatmul.mubr.bf16.gmra.mrb[0].mxu0 %v826
        %v955 = vpop.f32.mrb[0].mxu0
        %v956 = vadd.f32 0.0, %v955
        %v957 = vpop.f32.mrb[0].mxu0
        %v958 = vpop.f32.mrb[0].mxu0
        %v959 = vadd.f32 0.0, %v958
        %v960 = vpop.f32.mrb[0].mxu0
        %961 = vmatprep.mubr.bf16.mxu0 0
        %962 = vmatmul.mubr.bf16.gmra.mrb[0].mxu0 %v829
        %v963 = vpop.f32.mrb[0].mxu0
        %v964 = vadd.f32 0.0, %v963
        %v965 = vpop.f32.mrb[0].mxu0
        %v966 = vpop.f32.mrb[0].mxu0
        %v967 = vadd.f32 0.0, %v966
        %v968 = vpop.f32.mrb[0].mxu0
        %969 = vmatprep.mubr.bf16.mxu0 0
        %970 = vmatmul.mubr.bf16.gmra.mrb[0].mxu0 %v832
        %v971 = vpop.f32.mrb[0].mxu0
        %v972 = vadd.f32 0.0, %v971
        %v973 = vpop.f32.mrb[0].mxu0
        %v974 = vpop.f32.mrb[0].mxu0
        %v975 = vadd.f32 0.0, %v974
        %v976 = vpop.f32.mrb[0].mxu0
        %977 = vmatprep.mubr.bf16.mxu0 0
        %978 = vmatmul.mubr.bf16.gmra.mrb[0].mxu0 %v835
        %v979 = vpop.f32.mrb[0].mxu0
        %v980 = vadd.f32 0.0, %v979
        %v981 = vpop.f32.mrb[0].mxu0
        %v982 = vpop.f32.mrb[0].mxu0
        %v983 = vadd.f32 0.0, %v982
        %v984 = vpop.f32.mrb[0].mxu0
        %985 = vmatprep.mubr.bf16.mxu0 0
        %986 = vmatmul.mubr.bf16.gmra.mrb[0].mxu0 %v838
        %v987 = vpop.f32.mrb[0].mxu0
        %v988 = vadd.f32 0.0, %v987
        %v989 = vpop.f32.mrb[0].mxu0
        %v990 = vpop.f32.mrb[0].mxu0
        %v991 = vadd.f32 0.0, %v990
        %v992 = vpop.f32.mrb[0].mxu0
        %993 = vmatprep.mubr.bf16.mxu0 0
        %994 = vmatmul.mubr.bf16.gmra.mrb[0].mxu0 %v841
        %v995 = vpop.f32.mrb[0].mxu0
        %v996 = vadd.f32 0.0, %v995
        %v997 = vpop.f32.mrb[0].mxu0
        %v998 = vpop.f32.mrb[0].mxu0
        %v999 = vadd.f32 0.0, %v998
        %v1000 = vpop.f32.mrb[0].mxu0
        %1001 = vmatprep.mubr.bf16.mxu0 0
        %1002 = vmatmul.mubr.bf16.gmra.mrb[0].mxu0 %v844
        %v1003 = vpop.f32.mrb[0].mxu0
        %v1004 = vadd.f32 0.0, %v1003
        %v1005 = vpop.f32.mrb[0].mxu0
        %v1006 = vpop.f32.mrb[0].mxu0
        %v1007 = vadd.f32 0.0, %v1006
        %v1008 = vpop.f32.mrb[0].mxu0
        %1009 = vdwg.mxu0
        %v1010 = vadd.f32 %v622, %v884
        %v1011 = vadd.f32 %v625, %v887
        %v1012 = vadd.f32 %v630, %v892
        %v1013 = vadd.f32 %v633, %v895
        %v1014 = vadd.f32 %v638, %v900
        %v1015 = vadd.f32 %v641, %v903
        %v1016 = vadd.f32 %v646, %v908
        %v1017 = vadd.f32 %v649, %v911
        %v1018 = vadd.f32 %v654, %v916
        %v1019 = vadd.f32 %v657, %v919
        %v1020 = vadd.f32 %v662, %v924
        %v1021 = vadd.f32 %v665, %v927
        %v1022 = vadd.f32 %v670, %v932
        %v1023 = vadd.f32 %v673, %v935
        %v1024 = vadd.f32 %v678, %v940
        %v1025 = vadd.f32 %v681, %v943
        %v1026 = vadd.f32 %v686, %v948
        %v1027 = vadd.f32 %v689, %v951
        %v1028 = vadd.f32 %v694, %v956
        %v1029 = vadd.f32 %v697, %v959
        %v1030 = vadd.f32 %v702, %v964
        %v1031 = vadd.f32 %v705, %v967
        %v1032 = vadd.f32 %v710, %v972
        %v1033 = vadd.f32 %v713, %v975
        %v1034 = vadd.f32 %v718, %v980
        %v1035 = vadd.f32 %v721, %v983
        %v1036 = vadd.f32 %v726, %v988
        %v1037 = vadd.f32 %v729, %v991
        %v1038 = vadd.f32 %v734, %v996
        %v1039 = vadd.f32 %v737, %v999
        %v1040 = vadd.f32 %v742, %v1004
        %v1041 = vadd.f32 %v745, %v1007
        %s1042 = scalar_lea.vmem %s221, 24
        %v1043 = vld [vmem:[%s1042] sm:$0xff]
        %v1044 = vld [vmem:[%s1042 + $0x8] sm:$0xff]
        %v1045 = vld [vmem:[%s1042 + $0x18] sm:$0xff]
        %v1046 = vld [vmem:[%s1042 + $0x20] sm:$0xff]
        %v1047 = vld [vmem:[%s1042 + $0x30] sm:$0xff]
        %v1048 = vld [vmem:[%s1042 + $0x38] sm:$0xff]
        %v1049 = vld [vmem:[%s1042 + $0x48] sm:$0xff]
        %v1050 = vld [vmem:[%s1042 + $0x50] sm:$0xff]
        %v1051 = vld [vmem:[%s1042 + $0x60] sm:$0xff]
        %v1052 = vld [vmem:[%s1042 + $0x68] sm:$0xff]
        %v1053 = vld [vmem:[%s1042 + $0x78] sm:$0xff]
        %v1054 = vld [vmem:[%s1042 + $0x80] sm:$0xff]
        %v1055 = vld [vmem:[%s1042 + $0x90] sm:$0xff]
        %v1056 = vld [vmem:[%s1042 + $0x98] sm:$0xff]
        %v1057 = vld [vmem:[%s1042 + $0xa8] sm:$0xff]
        %v1058 = vld [vmem:[%s1042 + $0xb0] sm:$0xff]
        %v1059 = vld [vmem:[%s1042 + $0xc0] sm:$0xff]
        %v1060 = vld [vmem:[%s1042 + $0xc8] sm:$0xff]
        %v1061 = vld [vmem:[%s1042 + $0xd8] sm:$0xff]
        %v1062 = vld [vmem:[%s1042 + $0xe0] sm:$0xff]
        %v1063 = vld [vmem:[%s1042 + $0xf0] sm:$0xff]
        %v1064 = vld [vmem:[%s1042 + $0xf8] sm:$0xff]
        %v1065 = vld [vmem:[%s1042 + $0x108] sm:$0xff]
        %v1066 = vld [vmem:[%s1042 + $0x110] sm:$0xff]
        %v1067 = vld [vmem:[%s1042 + $0x120] sm:$0xff]
        %v1068 = vld [vmem:[%s1042 + $0x128] sm:$0xff]
        %v1069 = vld [vmem:[%s1042 + $0x138] sm:$0xff]
        %v1070 = vld [vmem:[%s1042 + $0x140] sm:$0xff]
        %v1071 = vld [vmem:[%s1042 + $0x150] sm:$0xff]
        %v1072 = vld [vmem:[%s1042 + $0x158] sm:$0xff]
        %v1073 = vld [vmem:[%s1042 + $0x168] sm:$0xff]
        %v1074 = vld [vmem:[%s1042 + $0x170] sm:$0xff]
        %v1075 = vpack.c.bf16 %v1044, %v1043
        %v1076 = vpack.c.bf16 %v1046, %v1045
        %v1077 = vpack.c.bf16 %v1048, %v1047
        %v1078 = vpack.c.bf16 %v1050, %v1049
        %v1079 = vpack.c.bf16 %v1052, %v1051
        %v1080 = vpack.c.bf16 %v1054, %v1053
        %v1081 = vpack.c.bf16 %v1056, %v1055
        %v1082 = vpack.c.bf16 %v1058, %v1057
        %v1083 = vpack.c.bf16 %v1060, %v1059
        %v1084 = vpack.c.bf16 %v1062, %v1061
        %v1085 = vpack.c.bf16 %v1064, %v1063
        %v1086 = vpack.c.bf16 %v1066, %v1065
        %v1087 = vpack.c.bf16 %v1068, %v1067
        %v1088 = vpack.c.bf16 %v1070, %v1069
        %v1089 = vpack.c.bf16 %v1072, %v1071
        %v1090 = vpack.c.bf16 %v1074, %v1073
        %s1091 = scalar_lea.vmem %s1, 6
        %v1092 = vld [vmem:[%s1091] sm:$0x3]
        %v1094 = vsel %vm322, %v1075, 0
        %v1097 = vsel %vm322, %v1076, 0
        %v1100 = vsel %vm322, %v1077, 0
        %v1103 = vsel %vm322, %v1078, 0
        %v1106 = vsel %vm322, %v1079, 0
        %v1109 = vsel %vm322, %v1080, 0
        %v1112 = vsel %vm322, %v1081, 0
        %v1115 = vsel %vm322, %v1082, 0
        %v1118 = vsel %vm322, %v1083, 0
        %v1121 = vsel %vm322, %v1084, 0
        %v1124 = vsel %vm322, %v1085, 0
        %v1127 = vsel %vm322, %v1086, 0
        %v1130 = vsel %vm322, %v1087, 0
        %v1133 = vsel %vm322, %v1088, 0
        %v1136 = vsel %vm322, %v1089, 0
        %v1139 = vsel %vm322, %v1090, 0
        %v1142 = vsel %vm371, %v1092, 0
        %1144 = vmatprep.subr.bf16.mxu0 0
        %1145 = vmatpush1.bf16.msra.mxu0 %v1142
        %1146 = vmatprep.subr.bf16.mxu0 0
        %1147 = vmatpush1.bf16.msra.mxu0 0
        %1148 = vmatprep.subr.bf16.mxu0 0
        %1149 = vmatpush1.bf16.msra.mxu0 0
        %1150 = vmatprep.subr.bf16.mxu0 0
        %1151 = vmatpush1.bf16.msra.mxu0 0
        %1152 = vmatprep.subr.bf16.mxu0 0
        %1153 = vmatpush1.bf16.msra.mxu0 0
        %1154 = vmatprep.subr.bf16.mxu0 0
        %1155 = vmatpush1.bf16.msra.mxu0 0
        %1156 = vmatprep.subr.bf16.mxu0 0
        %1157 = vmatpush1.bf16.msra.mxu0 0
        %1158 = vmatprep.subr.bf16.mxu0 0
        %1159 = vmatpush1.bf16.msra.mxu0 0
        %1160 = vmatprep.subr.bf16.mxu0 0
        %1161 = vmatpush1.bf16.msra.mxu0 0
        %1162 = vmatprep.subr.bf16.mxu0 0
        %1163 = vmatpush1.bf16.msra.mxu0 0
        %1164 = vmatprep.subr.bf16.mxu0 0
        %1165 = vmatpush1.bf16.msra.mxu0 0
        %1166 = vmatprep.subr.bf16.mxu0 0
        %1167 = vmatpush1.bf16.msra.mxu0 0
        %1168 = vmatprep.subr.bf16.mxu0 0
        %1169 = vmatpush1.bf16.msra.mxu0 0
        %1170 = vmatprep.subr.bf16.mxu0 0
        %1171 = vmatpush1.bf16.msra.mxu0 0
        %1172 = vmatprep.subr.bf16.mxu0 0
        %1173 = vmatpush1.bf16.msra.mxu0 0
        %1174 = vmatprep.subr.bf16.mxu0 0
        %1175 = vmatpush1.bf16.msra.mxu0 0
        %1176 = vmatprep.mubr.bf16.mxu0 0
        %1177 = vmatmul.mubr.bf16.gmra.mrb[0].mxu0 %v1094
        %v1178 = vpop.f32.mrb[0].mxu0
        %v1179 = vadd.f32 0.0, %v1178
        %v1180 = vpop.f32.mrb[0].mxu0
        %v1181 = vpop.f32.mrb[0].mxu0
        %v1182 = vadd.f32 0.0, %v1181
        %v1183 = vpop.f32.mrb[0].mxu0
        %1184 = vmatprep.mubr.bf16.mxu0 0
        %1185 = vmatmul.mubr.bf16.gmra.mrb[0].mxu0 %v1097
        %v1186 = vpop.f32.mrb[0].mxu0
        %v1187 = vadd.f32 0.0, %v1186
        %v1188 = vpop.f32.mrb[0].mxu0
        %v1189 = vpop.f32.mrb[0].mxu0
        %v1190 = vadd.f32 0.0, %v1189
        %v1191 = vpop.f32.mrb[0].mxu0
        %1192 = vmatprep.mubr.bf16.mxu0 0
        %1193 = vmatmul.mubr.bf16.gmra.mrb[0].mxu0 %v1100
        %v1194 = vpop.f32.mrb[0].mxu0
        %v1195 = vadd.f32 0.0, %v1194
        %v1196 = vpop.f32.mrb[0].mxu0
        %v1197 = vpop.f32.mrb[0].mxu0
        %v1198 = vadd.f32 0.0, %v1197
        %v1199 = vpop.f32.mrb[0].mxu0
        %1200 = vmatprep.mubr.bf16.mxu0 0
        %1201 = vmatmul.mubr.bf16.gmra.mrb[0].mxu0 %v1103
        %v1202 = vpop.f32.mrb[0].mxu0
        %v1203 = vadd.f32 0.0, %v1202
        %v1204 = vpop.f32.mrb[0].mxu0
        %v1205 = vpop.f32.mrb[0].mxu0
        %v1206 = vadd.f32 0.0, %v1205
        %v1207 = vpop.f32.mrb[0].mxu0
        %1208 = vmatprep.mubr.bf16.mxu0 0
        %1209 = vmatmul.mubr.bf16.gmra.mrb[0].mxu0 %v1106
        %v1210 = vpop.f32.mrb[0].mxu0
        %v1211 = vadd.f32 0.0, %v1210
        %v1212 = vpop.f32.mrb[0].mxu0
        %v1213 = vpop.f32.mrb[0].mxu0
        %v1214 = vadd.f32 0.0, %v1213
        %v1215 = vpop.f32.mrb[0].mxu0
        %1216 = vmatprep.mubr.bf16.mxu0 0
        %1217 = vmatmul.mubr.bf16.gmra.mrb[0].mxu0 %v1109
        %v1218 = vpop.f32.mrb[0].mxu0
        %v1219 = vadd.f32 0.0, %v1218
        %v1220 = vpop.f32.mrb[0].mxu0
        %v1221 = vpop.f32.mrb[0].mxu0
        %v1222 = vadd.f32 0.0, %v1221
        %v1223 = vpop.f32.mrb[0].mxu0
        %1224 = vmatprep.mubr.bf16.mxu0 0
        %1225 = vmatmul.mubr.bf16.gmra.mrb[0].mxu0 %v1112
        %v1226 = vpop.f32.mrb[0].mxu0
        %v1227 = vadd.f32 0.0, %v1226
        %v1228 = vpop.f32.mrb[0].mxu0
        %v1229 = vpop.f32.mrb[0].mxu0
        %v1230 = vadd.f32 0.0, %v1229
        %v1231 = vpop.f32.mrb[0].mxu0
        %1232 = vmatprep.mubr.bf16.mxu0 0
        %1233 = vmatmul.mubr.bf16.gmra.mrb[0].mxu0 %v1115
        %v1234 = vpop.f32.mrb[0].mxu0
        %v1235 = vadd.f32 0.0, %v1234
        %v1236 = vpop.f32.mrb[0].mxu0
        %v1237 = vpop.f32.mrb[0].mxu0
        %v1238 = vadd.f32 0.0, %v1237
        %v1239 = vpop.f32.mrb[0].mxu0
        %1240 = vmatprep.mubr.bf16.mxu0 0
        %1241 = vmatmul.mubr.bf16.gmra.mrb[0].mxu0 %v1118
        %v1242 = vpop.f32.mrb[0].mxu0
        %v1243 = vadd.f32 0.0, %v1242
        %v1244 = vpop.f32.mrb[0].mxu0
        %v1245 = vpop.f32.mrb[0].mxu0
        %v1246 = vadd.f32 0.0, %v1245
        %v1247 = vpop.f32.mrb[0].mxu0
        %1248 = vmatprep.mubr.bf16.mxu0 0
        %1249 = vmatmul.mubr.bf16.gmra.mrb[0].mxu0 %v1121
        %v1250 = vpop.f32.mrb[0].mxu0
        %v1251 = vadd.f32 0.0, %v1250
        %v1252 = vpop.f32.mrb[0].mxu0
        %v1253 = vpop.f32.mrb[0].mxu0
        %v1254 = vadd.f32 0.0, %v1253
        %v1255 = vpop.f32.mrb[0].mxu0
        %1256 = vmatprep.mubr.bf16.mxu0 0
        %1257 = vmatmul.mubr.bf16.gmra.mrb[0].mxu0 %v1124
        %v1258 = vpop.f32.mrb[0].mxu0
        %v1259 = vadd.f32 0.0, %v1258
        %v1260 = vpop.f32.mrb[0].mxu0
        %v1261 = vpop.f32.mrb[0].mxu0
        %v1262 = vadd.f32 0.0, %v1261
        %v1263 = vpop.f32.mrb[0].mxu0
        %1264 = vmatprep.mubr.bf16.mxu0 0
        %1265 = vmatmul.mubr.bf16.gmra.mrb[0].mxu0 %v1127
        %v1266 = vpop.f32.mrb[0].mxu0
        %v1267 = vadd.f32 0.0, %v1266
        %v1268 = vpop.f32.mrb[0].mxu0
        %v1269 = vpop.f32.mrb[0].mxu0
        %v1270 = vadd.f32 0.0, %v1269
        %v1271 = vpop.f32.mrb[0].mxu0
        %1272 = vmatprep.mubr.bf16.mxu0 0
        %1273 = vmatmul.mubr.bf16.gmra.mrb[0].mxu0 %v1130
        %v1274 = vpop.f32.mrb[0].mxu0
        %v1275 = vadd.f32 0.0, %v1274
        %v1276 = vpop.f32.mrb[0].mxu0
        %v1277 = vpop.f32.mrb[0].mxu0
        %v1278 = vadd.f32 0.0, %v1277
        %v1279 = vpop.f32.mrb[0].mxu0
        %1280 = vmatprep.mubr.bf16.mxu0 0
        %1281 = vmatmul.mubr.bf16.gmra.mrb[0].mxu0 %v1133
        %v1282 = vpop.f32.mrb[0].mxu0
        %v1283 = vadd.f32 0.0, %v1282
        %v1284 = vpop.f32.mrb[0].mxu0
        %v1285 = vpop.f32.mrb[0].mxu0
        %v1286 = vadd.f32 0.0, %v1285
        %v1287 = vpop.f32.mrb[0].mxu0
        %1288 = vmatprep.mubr.bf16.mxu0 0
        %1289 = vmatmul.mubr.bf16.gmra.mrb[0].mxu0 %v1136
        %v1290 = vpop.f32.mrb[0].mxu0
        %v1291 = vadd.f32 0.0, %v1290
        %v1292 = vpop.f32.mrb[0].mxu0
        %v1293 = vpop.f32.mrb[0].mxu0
        %v1294 = vadd.f32 0.0, %v1293
        %v1295 = vpop.f32.mrb[0].mxu0
        %1296 = vmatprep.mubr.bf16.mxu0 0
        %1297 = vmatmul.mubr.bf16.gmra.mrb[0].mxu0 %v1139
        %v1298 = vpop.f32.mrb[0].mxu0
        %v1299 = vadd.f32 0.0, %v1298
        %v1300 = vpop.f32.mrb[0].mxu0
        %v1301 = vpop.f32.mrb[0].mxu0
        %v1302 = vadd.f32 0.0, %v1301
        %v1303 = vpop.f32.mrb[0].mxu0
        %1304 = vdwg.mxu0
        %v1305 = vadd.f32 %v1010, %v1179
        %v1306 = vadd.f32 %v1011, %v1182
        %v1307 = vadd.f32 %v1012, %v1187
        %v1308 = vadd.f32 %v1013, %v1190
        %v1309 = vadd.f32 %v1014, %v1195
        %v1310 = vadd.f32 %v1015, %v1198
        %v1311 = vadd.f32 %v1016, %v1203
        %v1312 = vadd.f32 %v1017, %v1206
        %v1313 = vadd.f32 %v1018, %v1211
        %v1314 = vadd.f32 %v1019, %v1214
        %v1315 = vadd.f32 %v1020, %v1219
        %v1316 = vadd.f32 %v1021, %v1222
        %v1317 = vadd.f32 %v1022, %v1227
        %v1318 = vadd.f32 %v1023, %v1230
        %v1319 = vadd.f32 %v1024, %v1235
        %v1320 = vadd.f32 %v1025, %v1238
        %v1321 = vadd.f32 %v1026, %v1243
        %v1322 = vadd.f32 %v1027, %v1246
        %v1323 = vadd.f32 %v1028, %v1251
        %v1324 = vadd.f32 %v1029, %v1254
        %v1325 = vadd.f32 %v1030, %v1259
        %v1326 = vadd.f32 %v1031, %v1262
        %v1327 = vadd.f32 %v1032, %v1267
        %v1328 = vadd.f32 %v1033, %v1270
        %v1329 = vadd.f32 %v1034, %v1275
        %v1330 = vadd.f32 %v1035, %v1278
        %v1331 = vadd.f32 %v1036, %v1283
        %v1332 = vadd.f32 %v1037, %v1286
        %v1333 = vadd.f32 %v1038, %v1291
        %v1334 = vadd.f32 %v1039, %v1294
        %v1335 = vadd.f32 %v1040, %v1299
        %v1336 = vadd.f32 %v1041, %v1302
        %v1337 = vld [vmem:[%s1042 + $0x1] sm:$0xff]
        %v1338 = vld [vmem:[%s1042 + $0x9] sm:$0xff]
        %v1339 = vld [vmem:[%s1042 + $0x19] sm:$0xff]
        %v1340 = vld [vmem:[%s1042 + $0x21] sm:$0xff]
        %v1341 = vld [vmem:[%s1042 + $0x31] sm:$0xff]
        %v1342 = vld [vmem:[%s1042 + $0x39] sm:$0xff]
        %v1343 = vld [vmem:[%s1042 + $0x49] sm:$0xff]
        %v1344 = vld [vmem:[%s1042 + $0x51] sm:$0xff]
        %v1345 = vld [vmem:[%s1042 + $0x61] sm:$0xff]
        %v1346 = vld [vmem:[%s1042 + $0x69] sm:$0xff]
        %v1347 = vld [vmem:[%s1042 + $0x79] sm:$0xff]
        %v1348 = vld [vmem:[%s1042 + $0x81] sm:$0xff]
        %v1349 = vld [vmem:[%s1042 + $0x91] sm:$0xff]
        %v1350 = vld [vmem:[%s1042 + $0x99] sm:$0xff]
        %v1351 = vld [vmem:[%s1042 + $0xa9] sm:$0xff]
        %v1352 = vld [vmem:[%s1042 + $0xb1] sm:$0xff]
        %v1353 = vld [vmem:[%s1042 + $0xc1] sm:$0xff]
        %v1354 = vld [vmem:[%s1042 + $0xc9] sm:$0xff]
        %v1355 = vld [vmem:[%s1042 + $0xd9] sm:$0xff]
        %v1356 = vld [vmem:[%s1042 + $0xe1] sm:$0xff]
        %v1357 = vld [vmem:[%s1042 + $0xf1] sm:$0xff]
        %v1358 = vld [vmem:[%s1042 + $0xf9] sm:$0xff]
        %v1359 = vld [vmem:[%s1042 + $0x109] sm:$0xff]
        %v1360 = vld [vmem:[%s1042 + $0x111] sm:$0xff]
        %v1361 = vld [vmem:[%s1042 + $0x121] sm:$0xff]
        %v1362 = vld [vmem:[%s1042 + $0x129] sm:$0xff]
        %v1363 = vld [vmem:[%s1042 + $0x139] sm:$0xff]
        %v1364 = vld [vmem:[%s1042 + $0x141] sm:$0xff]
        %v1365 = vld [vmem:[%s1042 + $0x151] sm:$0xff]
        %v1366 = vld [vmem:[%s1042 + $0x159] sm:$0xff]
        %v1367 = vld [vmem:[%s1042 + $0x169] sm:$0xff]
        %v1368 = vld [vmem:[%s1042 + $0x171] sm:$0xff]
        %v1369 = vpack.c.bf16 %v1338, %v1337
        %v1370 = vpack.c.bf16 %v1340, %v1339
        %v1371 = vpack.c.bf16 %v1342, %v1341
        %v1372 = vpack.c.bf16 %v1344, %v1343
        %v1373 = vpack.c.bf16 %v1346, %v1345
        %v1374 = vpack.c.bf16 %v1348, %v1347
        %v1375 = vpack.c.bf16 %v1350, %v1349
        %v1376 = vpack.c.bf16 %v1352, %v1351
        %v1377 = vpack.c.bf16 %v1354, %v1353
        %v1378 = vpack.c.bf16 %v1356, %v1355
        %v1379 = vpack.c.bf16 %v1358, %v1357
        %v1380 = vpack.c.bf16 %v1360, %v1359
        %v1381 = vpack.c.bf16 %v1362, %v1361
        %v1382 = vpack.c.bf16 %v1364, %v1363
        %v1383 = vpack.c.bf16 %v1366, %v1365
        %v1384 = vpack.c.bf16 %v1368, %v1367
        %s1385 = scalar_lea.vmem %s1, 8
        %v1386 = vld [vmem:[%s1385] sm:$0x3]
        %v1388 = vsel %vm322, %v1369, 0
        %v1391 = vsel %vm322, %v1370, 0
        %v1394 = vsel %vm322, %v1371, 0
        %v1397 = vsel %vm322, %v1372, 0
        %v1400 = vsel %vm322, %v1373, 0
        %v1403 = vsel %vm322, %v1374, 0
        %v1406 = vsel %vm322, %v1375, 0
        %v1409 = vsel %vm322, %v1376, 0
        %v1412 = vsel %vm322, %v1377, 0
        %v1415 = vsel %vm322, %v1378, 0
        %v1418 = vsel %vm322, %v1379, 0
        %v1421 = vsel %vm322, %v1380, 0
        %v1424 = vsel %vm322, %v1381, 0
        %v1427 = vsel %vm322, %v1382, 0
        %v1430 = vsel %vm322, %v1383, 0
        %v1433 = vsel %vm322, %v1384, 0
        %v1436 = vsel %vm371, %v1386, 0
        %1438 = vmatprep.subr.bf16.mxu0 0
        %1439 = vmatpush1.bf16.msra.mxu0 %v1436
        %1440 = vmatprep.subr.bf16.mxu0 0
        %1441 = vmatpush1.bf16.msra.mxu0 0
        %1442 = vmatprep.subr.bf16.mxu0 0
        %1443 = vmatpush1.bf16.msra.mxu0 0
        %1444 = vmatprep.subr.bf16.mxu0 0
        %1445 = vmatpush1.bf16.msra.mxu0 0
        %1446 = vmatprep.subr.bf16.mxu0 0
        %1447 = vmatpush1.bf16.msra.mxu0 0
        %1448 = vmatprep.subr.bf16.mxu0 0
        %1449 = vmatpush1.bf16.msra.mxu0 0
        %1450 = vmatprep.subr.bf16.mxu0 0
        %1451 = vmatpush1.bf16.msra.mxu0 0
        %1452 = vmatprep.subr.bf16.mxu0 0
        %1453 = vmatpush1.bf16.msra.mxu0 0
        %1454 = vmatprep.subr.bf16.mxu0 0
        %1455 = vmatpush1.bf16.msra.mxu0 0
        %1456 = vmatprep.subr.bf16.mxu0 0
        %1457 = vmatpush1.bf16.msra.mxu0 0
        %1458 = vmatprep.subr.bf16.mxu0 0
        %1459 = vmatpush1.bf16.msra.mxu0 0
        %1460 = vmatprep.subr.bf16.mxu0 0
        %1461 = vmatpush1.bf16.msra.mxu0 0
        %1462 = vmatprep.subr.bf16.mxu0 0
        %1463 = vmatpush1.bf16.msra.mxu0 0
        %1464 = vmatprep.subr.bf16.mxu0 0
        %1465 = vmatpush1.bf16.msra.mxu0 0
        %1466 = vmatprep.subr.bf16.mxu0 0
        %1467 = vmatpush1.bf16.msra.mxu0 0
        %1468 = vmatprep.subr.bf16.mxu0 0
        %1469 = vmatpush1.bf16.msra.mxu0 0
        %1470 = vmatprep.mubr.bf16.mxu0 0
        %1471 = vmatmul.mubr.bf16.gmra.mrb[0].mxu0 %v1388
        %v1472 = vpop.f32.mrb[0].mxu0
        %v1473 = vadd.f32 0.0, %v1472
        %v1474 = vpop.f32.mrb[0].mxu0
        %v1475 = vpop.f32.mrb[0].mxu0
        %v1476 = vadd.f32 0.0, %v1475
        %v1477 = vpop.f32.mrb[0].mxu0
        %1478 = vmatprep.mubr.bf16.mxu0 0
        %1479 = vmatmul.mubr.bf16.gmra.mrb[0].mxu0 %v1391
        %v1480 = vpop.f32.mrb[0].mxu0
        %v1481 = vadd.f32 0.0, %v1480
        %v1482 = vpop.f32.mrb[0].mxu0
        %v1483 = vpop.f32.mrb[0].mxu0
        %v1484 = vadd.f32 0.0, %v1483
        %v1485 = vpop.f32.mrb[0].mxu0
        %1486 = vmatprep.mubr.bf16.mxu0 0
        %1487 = vmatmul.mubr.bf16.gmra.mrb[0].mxu0 %v1394
        %v1488 = vpop.f32.mrb[0].mxu0
        %v1489 = vadd.f32 0.0, %v1488
        %v1490 = vpop.f32.mrb[0].mxu0
        %v1491 = vpop.f32.mrb[0].mxu0
        %v1492 = vadd.f32 0.0, %v1491
        %v1493 = vpop.f32.mrb[0].mxu0
        %1494 = vmatprep.mubr.bf16.mxu0 0
        %1495 = vmatmul.mubr.bf16.gmra.mrb[0].mxu0 %v1397
        %v1496 = vpop.f32.mrb[0].mxu0
        %v1497 = vadd.f32 0.0, %v1496
        %v1498 = vpop.f32.mrb[0].mxu0
        %v1499 = vpop.f32.mrb[0].mxu0
        %v1500 = vadd.f32 0.0, %v1499
        %v1501 = vpop.f32.mrb[0].mxu0
        %1502 = vmatprep.mubr.bf16.mxu0 0
        %1503 = vmatmul.mubr.bf16.gmra.mrb[0].mxu0 %v1400
        %v1504 = vpop.f32.mrb[0].mxu0
        %v1505 = vadd.f32 0.0, %v1504
        %v1506 = vpop.f32.mrb[0].mxu0
        %v1507 = vpop.f32.mrb[0].mxu0
        %v1508 = vadd.f32 0.0, %v1507
        %v1509 = vpop.f32.mrb[0].mxu0
        %1510 = vmatprep.mubr.bf16.mxu0 0
        %1511 = vmatmul.mubr.bf16.gmra.mrb[0].mxu0 %v1403
        %v1512 = vpop.f32.mrb[0].mxu0
        %v1513 = vadd.f32 0.0, %v1512
        %v1514 = vpop.f32.mrb[0].mxu0
        %v1515 = vpop.f32.mrb[0].mxu0
        %v1516 = vadd.f32 0.0, %v1515
        %v1517 = vpop.f32.mrb[0].mxu0
        %1518 = vmatprep.mubr.bf16.mxu0 0
        %1519 = vmatmul.mubr.bf16.gmra.mrb[0].mxu0 %v1406
        %v1520 = vpop.f32.mrb[0].mxu0
        %v1521 = vadd.f32 0.0, %v1520
        %v1522 = vpop.f32.mrb[0].mxu0
        %v1523 = vpop.f32.mrb[0].mxu0
        %v1524 = vadd.f32 0.0, %v1523
        %v1525 = vpop.f32.mrb[0].mxu0
        %1526 = vmatprep.mubr.bf16.mxu0 0
        %1527 = vmatmul.mubr.bf16.gmra.mrb[0].mxu0 %v1409
        %v1528 = vpop.f32.mrb[0].mxu0
        %v1529 = vadd.f32 0.0, %v1528
        %v1530 = vpop.f32.mrb[0].mxu0
        %v1531 = vpop.f32.mrb[0].mxu0
        %v1532 = vadd.f32 0.0, %v1531
        %v1533 = vpop.f32.mrb[0].mxu0
        %1534 = vmatprep.mubr.bf16.mxu0 0
        %1535 = vmatmul.mubr.bf16.gmra.mrb[0].mxu0 %v1412
        %v1536 = vpop.f32.mrb[0].mxu0
        %v1537 = vadd.f32 0.0, %v1536
        %v1538 = vpop.f32.mrb[0].mxu0
        %v1539 = vpop.f32.mrb[0].mxu0
        %v1540 = vadd.f32 0.0, %v1539
        %v1541 = vpop.f32.mrb[0].mxu0
        %1542 = vmatprep.mubr.bf16.mxu0 0
        %1543 = vmatmul.mubr.bf16.gmra.mrb[0].mxu0 %v1415
        %v1544 = vpop.f32.mrb[0].mxu0
        %v1545 = vadd.f32 0.0, %v1544
        %v1546 = vpop.f32.mrb[0].mxu0
        %v1547 = vpop.f32.mrb[0].mxu0
        %v1548 = vadd.f32 0.0, %v1547
        %v1549 = vpop.f32.mrb[0].mxu0
        %1550 = vmatprep.mubr.bf16.mxu0 0
        %1551 = vmatmul.mubr.bf16.gmra.mrb[0].mxu0 %v1418
        %v1552 = vpop.f32.mrb[0].mxu0
        %v1553 = vadd.f32 0.0, %v1552
        %v1554 = vpop.f32.mrb[0].mxu0
        %v1555 = vpop.f32.mrb[0].mxu0
        %v1556 = vadd.f32 0.0, %v1555
        %v1557 = vpop.f32.mrb[0].mxu0
        %1558 = vmatprep.mubr.bf16.mxu0 0
        %1559 = vmatmul.mubr.bf16.gmra.mrb[0].mxu0 %v1421
        %v1560 = vpop.f32.mrb[0].mxu0
        %v1561 = vadd.f32 0.0, %v1560
        %v1562 = vpop.f32.mrb[0].mxu0
        %v1563 = vpop.f32.mrb[0].mxu0
        %v1564 = vadd.f32 0.0, %v1563
        %v1565 = vpop.f32.mrb[0].mxu0
        %1566 = vmatprep.mubr.bf16.mxu0 0
        %1567 = vmatmul.mubr.bf16.gmra.mrb[0].mxu0 %v1424
        %v1568 = vpop.f32.mrb[0].mxu0
        %v1569 = vadd.f32 0.0, %v1568
        %v1570 = vpop.f32.mrb[0].mxu0
        %v1571 = vpop.f32.mrb[0].mxu0
        %v1572 = vadd.f32 0.0, %v1571
        %v1573 = vpop.f32.mrb[0].mxu0
        %1574 = vmatprep.mubr.bf16.mxu0 0
        %1575 = vmatmul.mubr.bf16.gmra.mrb[0].mxu0 %v1427
        %v1576 = vpop.f32.mrb[0].mxu0
        %v1577 = vadd.f32 0.0, %v1576
        %v1578 = vpop.f32.mrb[0].mxu0
        %v1579 = vpop.f32.mrb[0].mxu0
        %v1580 = vadd.f32 0.0, %v1579
        %v1581 = vpop.f32.mrb[0].mxu0
        %1582 = vmatprep.mubr.bf16.mxu0 0
        %1583 = vmatmul.mubr.bf16.gmra.mrb[0].mxu0 %v1430
        %v1584 = vpop.f32.mrb[0].mxu0
        %v1585 = vadd.f32 0.0, %v1584
        %v1586 = vpop.f32.mrb[0].mxu0
        %v1587 = vpop.f32.mrb[0].mxu0
        %v1588 = vadd.f32 0.0, %v1587
        %v1589 = vpop.f32.mrb[0].mxu0
        %1590 = vmatprep.mubr.bf16.mxu0 0
        %1591 = vmatmul.mubr.bf16.gmra.mrb[0].mxu0 %v1433
        %v1592 = vpop.f32.mrb[0].mxu0
        %v1593 = vadd.f32 0.0, %v1592
        %v1594 = vpop.f32.mrb[0].mxu0
        %v1595 = vpop.f32.mrb[0].mxu0
        %v1596 = vadd.f32 0.0, %v1595
        %v1597 = vpop.f32.mrb[0].mxu0
        %1598 = vdwg.mxu0
        %v1599 = vadd.f32 %v1305, %v1473
        %v1600 = vadd.f32 %v1306, %v1476
        %v1601 = vadd.f32 %v1307, %v1481
        %v1602 = vadd.f32 %v1308, %v1484
        %v1603 = vadd.f32 %v1309, %v1489
        %v1604 = vadd.f32 %v1310, %v1492
        %v1605 = vadd.f32 %v1311, %v1497
        %v1606 = vadd.f32 %v1312, %v1500
        %v1607 = vadd.f32 %v1313, %v1505
        %v1608 = vadd.f32 %v1314, %v1508
        %v1609 = vadd.f32 %v1315, %v1513
        %v1610 = vadd.f32 %v1316, %v1516
        %v1611 = vadd.f32 %v1317, %v1521
        %v1612 = vadd.f32 %v1318, %v1524
        %v1613 = vadd.f32 %v1319, %v1529
        %v1614 = vadd.f32 %v1320, %v1532
        %v1615 = vadd.f32 %v1321, %v1537
        %v1616 = vadd.f32 %v1322, %v1540
        %v1617 = vadd.f32 %v1323, %v1545
        %v1618 = vadd.f32 %v1324, %v1548
        %v1619 = vadd.f32 %v1325, %v1553
        %v1620 = vadd.f32 %v1326, %v1556
        %v1621 = vadd.f32 %v1327, %v1561
        %v1622 = vadd.f32 %v1328, %v1564
        %v1623 = vadd.f32 %v1329, %v1569
        %v1624 = vadd.f32 %v1330, %v1572
        %v1625 = vadd.f32 %v1331, %v1577
        %v1626 = vadd.f32 %v1332, %v1580
        %v1627 = vadd.f32 %v1333, %v1585
        %v1628 = vadd.f32 %v1334, %v1588
        %v1629 = vadd.f32 %v1335, %v1593
        %v1630 = vadd.f32 %v1336, %v1596
        %v1631 = vld [vmem:[%s1042 + $0x2] sm:$0xff]
        %v1632 = vld [vmem:[%s1042 + $0xa] sm:$0xff]
        %v1633 = vld [vmem:[%s1042 + $0x1a] sm:$0xff]
        %v1634 = vld [vmem:[%s1042 + $0x22] sm:$0xff]
        %v1635 = vld [vmem:[%s1042 + $0x32] sm:$0xff]
        %v1636 = vld [vmem:[%s1042 + $0x3a] sm:$0xff]
        %v1637 = vld [vmem:[%s1042 + $0x4a] sm:$0xff]
        %v1638 = vld [vmem:[%s1042 + $0x52] sm:$0xff]
        %v1639 = vld [vmem:[%s1042 + $0x62] sm:$0xff]
        %v1640 = vld [vmem:[%s1042 + $0x6a] sm:$0xff]
        %v1641 = vld [vmem:[%s1042 + $0x7a] sm:$0xff]
        %v1642 = vld [vmem:[%s1042 + $0x82] sm:$0xff]
        %v1643 = vld [vmem:[%s1042 + $0x92] sm:$0xff]
        %v1644 = vld [vmem:[%s1042 + $0x9a] sm:$0xff]
        %v1645 = vld [vmem:[%s1042 + $0xaa] sm:$0xff]
        %v1646 = vld [vmem:[%s1042 + $0xb2] sm:$0xff]
        %v1647 = vld [vmem:[%s1042 + $0xc2] sm:$0xff]
        %v1648 = vld [vmem:[%s1042 + $0xca] sm:$0xff]
        %v1649 = vld [vmem:[%s1042 + $0xda] sm:$0xff]
        %v1650 = vld [vmem:[%s1042 + $0xe2] sm:$0xff]
        %v1651 = vld [vmem:[%s1042 + $0xf2] sm:$0xff]
        %v1652 = vld [vmem:[%s1042 + $0xfa] sm:$0xff]
        %v1653 = vld [vmem:[%s1042 + $0x10a] sm:$0xff]
        %v1654 = vld [vmem:[%s1042 + $0x112] sm:$0xff]
        %v1655 = vld [vmem:[%s1042 + $0x122] sm:$0xff]
        %v1656 = vld [vmem:[%s1042 + $0x12a] sm:$0xff]
        %v1657 = vld [vmem:[%s1042 + $0x13a] sm:$0xff]
        %v1658 = vld [vmem:[%s1042 + $0x142] sm:$0xff]
        %v1659 = vld [vmem:[%s1042 + $0x152] sm:$0xff]
        %v1660 = vld [vmem:[%s1042 + $0x15a] sm:$0xff]
        %v1661 = vld [vmem:[%s1042 + $0x16a] sm:$0xff]
        %v1662 = vld [vmem:[%s1042 + $0x172] sm:$0xff]
        %v1663 = vpack.c.bf16 %v1632, %v1631
        %v1664 = vpack.c.bf16 %v1634, %v1633
        %v1665 = vpack.c.bf16 %v1636, %v1635
        %v1666 = vpack.c.bf16 %v1638, %v1637
        %v1667 = vpack.c.bf16 %v1640, %v1639
        %v1668 = vpack.c.bf16 %v1642, %v1641
        %v1669 = vpack.c.bf16 %v1644, %v1643
        %v1670 = vpack.c.bf16 %v1646, %v1645
        %v1671 = vpack.c.bf16 %v1648, %v1647
        %v1672 = vpack.c.bf16 %v1650, %v1649
        %v1673 = vpack.c.bf16 %v1652, %v1651
        %v1674 = vpack.c.bf16 %v1654, %v1653
        %v1675 = vpack.c.bf16 %v1656, %v1655
        %v1676 = vpack.c.bf16 %v1658, %v1657
        %v1677 = vpack.c.bf16 %v1660, %v1659
        %v1678 = vpack.c.bf16 %v1662, %v1661
        %s1679 = scalar_lea.vmem %s1, 10
        %v1680 = vld [vmem:[%s1679] sm:$0x3]
        %v1682 = vsel %vm322, %v1663, 0
        %v1685 = vsel %vm322, %v1664, 0
        %v1688 = vsel %vm322, %v1665, 0
        %v1691 = vsel %vm322, %v1666, 0
        %v1694 = vsel %vm322, %v1667, 0
        %v1697 = vsel %vm322, %v1668, 0
        %v1700 = vsel %vm322, %v1669, 0
        %v1703 = vsel %vm322, %v1670, 0
        %v1706 = vsel %vm322, %v1671, 0
        %v1709 = vsel %vm322, %v1672, 0
        %v1712 = vsel %vm322, %v1673, 0
        %v1715 = vsel %vm322, %v1674, 0
        %v1718 = vsel %vm322, %v1675, 0
        %v1721 = vsel %vm322, %v1676, 0
        %v1724 = vsel %vm322, %v1677, 0
        %v1727 = vsel %vm322, %v1678, 0
        %v1730 = vsel %vm371, %v1680, 0
        %1732 = vmatprep.subr.bf16.mxu0 0
        %1733 = vmatpush1.bf16.msra.mxu0 %v1730
        %1734 = vmatprep.subr.bf16.mxu0 0
        %1735 = vmatpush1.bf16.msra.mxu0 0
        %1736 = vmatprep.subr.bf16.mxu0 0
        %1737 = vmatpush1.bf16.msra.mxu0 0
        %1738 = vmatprep.subr.bf16.mxu0 0
        %1739 = vmatpush1.bf16.msra.mxu0 0
        %1740 = vmatprep.subr.bf16.mxu0 0
        %1741 = vmatpush1.bf16.msra.mxu0 0
        %1742 = vmatprep.subr.bf16.mxu0 0
        %1743 = vmatpush1.bf16.msra.mxu0 0
        %1744 = vmatprep.subr.bf16.mxu0 0
        %1745 = vmatpush1.bf16.msra.mxu0 0
        %1746 = vmatprep.subr.bf16.mxu0 0
        %1747 = vmatpush1.bf16.msra.mxu0 0
        %1748 = vmatprep.subr.bf16.mxu0 0
        %1749 = vmatpush1.bf16.msra.mxu0 0
        %1750 = vmatprep.subr.bf16.mxu0 0
        %1751 = vmatpush1.bf16.msra.mxu0 0
        %1752 = vmatprep.subr.bf16.mxu0 0
        %1753 = vmatpush1.bf16.msra.mxu0 0
        %1754 = vmatprep.subr.bf16.mxu0 0
        %1755 = vmatpush1.bf16.msra.mxu0 0
        %1756 = vmatprep.subr.bf16.mxu0 0
        %1757 = vmatpush1.bf16.msra.mxu0 0
        %1758 = vmatprep.subr.bf16.mxu0 0
        %1759 = vmatpush1.bf16.msra.mxu0 0
        %1760 = vmatprep.subr.bf16.mxu0 0
        %1761 = vmatpush1.bf16.msra.mxu0 0
        %1762 = vmatprep.subr.bf16.mxu0 0
        %1763 = vmatpush1.bf16.msra.mxu0 0
        %1764 = vmatprep.mubr.bf16.mxu0 0
        %1765 = vmatmul.mubr.bf16.gmra.mrb[0].mxu0 %v1682
        %v1766 = vpop.f32.mrb[0].mxu0
        %v1767 = vadd.f32 0.0, %v1766
        %v1768 = vpop.f32.mrb[0].mxu0
        %v1769 = vpop.f32.mrb[0].mxu0
        %v1770 = vadd.f32 0.0, %v1769
        %v1771 = vpop.f32.mrb[0].mxu0
        %1772 = vmatprep.mubr.bf16.mxu0 0
        %1773 = vmatmul.mubr.bf16.gmra.mrb[0].mxu0 %v1685
        %v1774 = vpop.f32.mrb[0].mxu0
        %v1775 = vadd.f32 0.0, %v1774
        %v1776 = vpop.f32.mrb[0].mxu0
        %v1777 = vpop.f32.mrb[0].mxu0
        %v1778 = vadd.f32 0.0, %v1777
        %v1779 = vpop.f32.mrb[0].mxu0
        %1780 = vmatprep.mubr.bf16.mxu0 0
        %1781 = vmatmul.mubr.bf16.gmra.mrb[0].mxu0 %v1688
        %v1782 = vpop.f32.mrb[0].mxu0
        %v1783 = vadd.f32 0.0, %v1782
        %v1784 = vpop.f32.mrb[0].mxu0
        %v1785 = vpop.f32.mrb[0].mxu0
        %v1786 = vadd.f32 0.0, %v1785
        %v1787 = vpop.f32.mrb[0].mxu0
        %1788 = vmatprep.mubr.bf16.mxu0 0
        %1789 = vmatmul.mubr.bf16.gmra.mrb[0].mxu0 %v1691
        %v1790 = vpop.f32.mrb[0].mxu0
        %v1791 = vadd.f32 0.0, %v1790
        %v1792 = vpop.f32.mrb[0].mxu0
        %v1793 = vpop.f32.mrb[0].mxu0
        %v1794 = vadd.f32 0.0, %v1793
        %v1795 = vpop.f32.mrb[0].mxu0
        %1796 = vmatprep.mubr.bf16.mxu0 0
        %1797 = vmatmul.mubr.bf16.gmra.mrb[0].mxu0 %v1694
        %v1798 = vpop.f32.mrb[0].mxu0
        %v1799 = vadd.f32 0.0, %v1798
        %v1800 = vpop.f32.mrb[0].mxu0
        %v1801 = vpop.f32.mrb[0].mxu0
        %v1802 = vadd.f32 0.0, %v1801
        %v1803 = vpop.f32.mrb[0].mxu0
        %1804 = vmatprep.mubr.bf16.mxu0 0
        %1805 = vmatmul.mubr.bf16.gmra.mrb[0].mxu0 %v1697
        %v1806 = vpop.f32.mrb[0].mxu0
        %v1807 = vadd.f32 0.0, %v1806
        %v1808 = vpop.f32.mrb[0].mxu0
        %v1809 = vpop.f32.mrb[0].mxu0
        %v1810 = vadd.f32 0.0, %v1809
        %v1811 = vpop.f32.mrb[0].mxu0
        %1812 = vmatprep.mubr.bf16.mxu0 0
        %1813 = vmatmul.mubr.bf16.gmra.mrb[0].mxu0 %v1700
        %v1814 = vpop.f32.mrb[0].mxu0
        %v1815 = vadd.f32 0.0, %v1814
        %v1816 = vpop.f32.mrb[0].mxu0
        %v1817 = vpop.f32.mrb[0].mxu0
        %v1818 = vadd.f32 0.0, %v1817
        %v1819 = vpop.f32.mrb[0].mxu0
        %1820 = vmatprep.mubr.bf16.mxu0 0
        %1821 = vmatmul.mubr.bf16.gmra.mrb[0].mxu0 %v1703
        %v1822 = vpop.f32.mrb[0].mxu0
        %v1823 = vadd.f32 0.0, %v1822
        %v1824 = vpop.f32.mrb[0].mxu0
        %v1825 = vpop.f32.mrb[0].mxu0
        %v1826 = vadd.f32 0.0, %v1825
        %v1827 = vpop.f32.mrb[0].mxu0
        %1828 = vmatprep.mubr.bf16.mxu0 0
        %1829 = vmatmul.mubr.bf16.gmra.mrb[0].mxu0 %v1706
        %v1830 = vpop.f32.mrb[0].mxu0
        %v1831 = vadd.f32 0.0, %v1830
        %v1832 = vpop.f32.mrb[0].mxu0
        %v1833 = vpop.f32.mrb[0].mxu0
        %v1834 = vadd.f32 0.0, %v1833
        %v1835 = vpop.f32.mrb[0].mxu0
        %1836 = vmatprep.mubr.bf16.mxu0 0
        %1837 = vmatmul.mubr.bf16.gmra.mrb[0].mxu0 %v1709
        %v1838 = vpop.f32.mrb[0].mxu0
        %v1839 = vadd.f32 0.0, %v1838
        %v1840 = vpop.f32.mrb[0].mxu0
        %v1841 = vpop.f32.mrb[0].mxu0
        %v1842 = vadd.f32 0.0, %v1841
        %v1843 = vpop.f32.mrb[0].mxu0
        %1844 = vmatprep.mubr.bf16.mxu0 0
        %1845 = vmatmul.mubr.bf16.gmra.mrb[0].mxu0 %v1712
        %v1846 = vpop.f32.mrb[0].mxu0
        %v1847 = vadd.f32 0.0, %v1846
        %v1848 = vpop.f32.mrb[0].mxu0
        %v1849 = vpop.f32.mrb[0].mxu0
        %v1850 = vadd.f32 0.0, %v1849
        %v1851 = vpop.f32.mrb[0].mxu0
        %1852 = vmatprep.mubr.bf16.mxu0 0
        %1853 = vmatmul.mubr.bf16.gmra.mrb[0].mxu0 %v1715
        %v1854 = vpop.f32.mrb[0].mxu0
        %v1855 = vadd.f32 0.0, %v1854
        %v1856 = vpop.f32.mrb[0].mxu0
        %v1857 = vpop.f32.mrb[0].mxu0
        %v1858 = vadd.f32 0.0, %v1857
        %v1859 = vpop.f32.mrb[0].mxu0
        %1860 = vmatprep.mubr.bf16.mxu0 0
        %1861 = vmatmul.mubr.bf16.gmra.mrb[0].mxu0 %v1718
        %v1862 = vpop.f32.mrb[0].mxu0
        %v1863 = vadd.f32 0.0, %v1862
        %v1864 = vpop.f32.mrb[0].mxu0
        %v1865 = vpop.f32.mrb[0].mxu0
        %v1866 = vadd.f32 0.0, %v1865
        %v1867 = vpop.f32.mrb[0].mxu0
        %1868 = vmatprep.mubr.bf16.mxu0 0
        %1869 = vmatmul.mubr.bf16.gmra.mrb[0].mxu0 %v1721
        %v1870 = vpop.f32.mrb[0].mxu0
        %v1871 = vadd.f32 0.0, %v1870
        %v1872 = vpop.f32.mrb[0].mxu0
        %v1873 = vpop.f32.mrb[0].mxu0
        %v1874 = vadd.f32 0.0, %v1873
        %v1875 = vpop.f32.mrb[0].mxu0
        %1876 = vmatprep.mubr.bf16.mxu0 0
        %1877 = vmatmul.mubr.bf16.gmra.mrb[0].mxu0 %v1724
        %v1878 = vpop.f32.mrb[0].mxu0
        %v1879 = vadd.f32 0.0, %v1878
        %v1880 = vpop.f32.mrb[0].mxu0
        %v1881 = vpop.f32.mrb[0].mxu0
        %v1882 = vadd.f32 0.0, %v1881
        %v1883 = vpop.f32.mrb[0].mxu0
        %1884 = vmatprep.mubr.bf16.mxu0 0
        %1885 = vmatmul.mubr.bf16.gmra.mrb[0].mxu0 %v1727
        %v1886 = vpop.f32.mrb[0].mxu0
        %v1887 = vadd.f32 0.0, %v1886
        %v1888 = vpop.f32.mrb[0].mxu0
        %v1889 = vpop.f32.mrb[0].mxu0
        %v1890 = vadd.f32 0.0, %v1889
        %v1891 = vpop.f32.mrb[0].mxu0
        %1892 = vdwg.mxu0
        %v1893 = vadd.f32 %v1599, %v1767
        %v1894 = vadd.f32 %v1600, %v1770
        %v1895 = vadd.f32 %v1601, %v1775
        %v1896 = vadd.f32 %v1602, %v1778
        %v1897 = vadd.f32 %v1603, %v1783
        %v1898 = vadd.f32 %v1604, %v1786
        %v1899 = vadd.f32 %v1605, %v1791
        %v1900 = vadd.f32 %v1606, %v1794
        %v1901 = vadd.f32 %v1607, %v1799
        %v1902 = vadd.f32 %v1608, %v1802
        %v1903 = vadd.f32 %v1609, %v1807
        %v1904 = vadd.f32 %v1610, %v1810
        %v1905 = vadd.f32 %v1611, %v1815
        %v1906 = vadd.f32 %v1612, %v1818
        %v1907 = vadd.f32 %v1613, %v1823
        %v1908 = vadd.f32 %v1614, %v1826
        %v1909 = vadd.f32 %v1615, %v1831
        %v1910 = vadd.f32 %v1616, %v1834
        %v1911 = vadd.f32 %v1617, %v1839
        %v1912 = vadd.f32 %v1618, %v1842
        %v1913 = vadd.f32 %v1619, %v1847
        %v1914 = vadd.f32 %v1620, %v1850
        %v1915 = vadd.f32 %v1621, %v1855
        %v1916 = vadd.f32 %v1622, %v1858
        %v1917 = vadd.f32 %v1623, %v1863
        %v1918 = vadd.f32 %v1624, %v1866
        %v1919 = vadd.f32 %v1625, %v1871
        %v1920 = vadd.f32 %v1626, %v1874
        %v1921 = vadd.f32 %v1627, %v1879
        %v1922 = vadd.f32 %v1628, %v1882
        %v1923 = vadd.f32 %v1629, %v1887
        %v1924 = vadd.f32 %v1630, %v1890
        %s1925 = scalar_lea.vmem %s221, 48
        %v1926 = vld [vmem:[%s1925] sm:$0xff]
        %v1927 = vld [vmem:[%s1925 + $0x8] sm:$0xff]
        %v1928 = vld [vmem:[%s1925 + $0x18] sm:$0xff]
        %v1929 = vld [vmem:[%s1925 + $0x20] sm:$0xff]
        %v1930 = vld [vmem:[%s1925 + $0x30] sm:$0xff]
        %v1931 = vld [vmem:[%s1925 + $0x38] sm:$0xff]
        %v1932 = vld [vmem:[%s1925 + $0x48] sm:$0xff]
        %v1933 = vld [vmem:[%s1925 + $0x50] sm:$0xff]
        %v1934 = vld [vmem:[%s1925 + $0x60] sm:$0xff]
        %v1935 = vld [vmem:[%s1925 + $0x68] sm:$0xff]
        %v1936 = vld [vmem:[%s1925 + $0x78] sm:$0xff]
        %v1937 = vld [vmem:[%s1925 + $0x80] sm:$0xff]
        %v1938 = vld [vmem:[%s1925 + $0x90] sm:$0xff]
        %v1939 = vld [vmem:[%s1925 + $0x98] sm:$0xff]
        %v1940 = vld [vmem:[%s1925 + $0xa8] sm:$0xff]
        %v1941 = vld [vmem:[%s1925 + $0xb0] sm:$0xff]
        %v1942 = vld [vmem:[%s1925 + $0xc0] sm:$0xff]
        %v1943 = vld [vmem:[%s1925 + $0xc8] sm:$0xff]
        %v1944 = vld [vmem:[%s1925 + $0xd8] sm:$0xff]
        %v1945 = vld [vmem:[%s1925 + $0xe0] sm:$0xff]
        %v1946 = vld [vmem:[%s1925 + $0xf0] sm:$0xff]
        %v1947 = vld [vmem:[%s1925 + $0xf8] sm:$0xff]
        %v1948 = vld [vmem:[%s1925 + $0x108] sm:$0xff]
        %v1949 = vld [vmem:[%s1925 + $0x110] sm:$0xff]
        %v1950 = vld [vmem:[%s1925 + $0x120] sm:$0xff]
        %v1951 = vld [vmem:[%s1925 + $0x128] sm:$0xff]
        %v1952 = vld [vmem:[%s1925 + $0x138] sm:$0xff]
        %v1953 = vld [vmem:[%s1925 + $0x140] sm:$0xff]
        %v1954 = vld [vmem:[%s1925 + $0x150] sm:$0xff]
        %v1955 = vld [vmem:[%s1925 + $0x158] sm:$0xff]
        %v1956 = vld [vmem:[%s1925 + $0x168] sm:$0xff]
        %v1957 = vld [vmem:[%s1925 + $0x170] sm:$0xff]
        %v1958 = vpack.c.bf16 %v1927, %v1926
        %v1959 = vpack.c.bf16 %v1929, %v1928
        %v1960 = vpack.c.bf16 %v1931, %v1930
        %v1961 = vpack.c.bf16 %v1933, %v1932
        %v1962 = vpack.c.bf16 %v1935, %v1934
        %v1963 = vpack.c.bf16 %v1937, %v1936
        %v1964 = vpack.c.bf16 %v1939, %v1938
        %v1965 = vpack.c.bf16 %v1941, %v1940
        %v1966 = vpack.c.bf16 %v1943, %v1942
        %v1967 = vpack.c.bf16 %v1945, %v1944
        %v1968 = vpack.c.bf16 %v1947, %v1946
        %v1969 = vpack.c.bf16 %v1949, %v1948
        %v1970 = vpack.c.bf16 %v1951, %v1950
        %v1971 = vpack.c.bf16 %v1953, %v1952
        %v1972 = vpack.c.bf16 %v1955, %v1954
        %v1973 = vpack.c.bf16 %v1957, %v1956
        %s1974 = scalar_lea.vmem %s1, 12
        %v1975 = vld [vmem:[%s1974] sm:$0x3]
        %v1977 = vsel %vm322, %v1958, 0
        %v1980 = vsel %vm322, %v1959, 0
        %v1983 = vsel %vm322, %v1960, 0
        %v1986 = vsel %vm322, %v1961, 0
        %v1989 = vsel %vm322, %v1962, 0
        %v1992 = vsel %vm322, %v1963, 0
        %v1995 = vsel %vm322, %v1964, 0
        %v1998 = vsel %vm322, %v1965, 0
        %v2001 = vsel %vm322, %v1966, 0
        %v2004 = vsel %vm322, %v1967, 0
        %v2007 = vsel %vm322, %v1968, 0
        %v2010 = vsel %vm322, %v1969, 0
        %v2013 = vsel %vm322, %v1970, 0
        %v2016 = vsel %vm322, %v1971, 0
        %v2019 = vsel %vm322, %v1972, 0
        %v2022 = vsel %vm322, %v1973, 0
        %v2025 = vsel %vm371, %v1975, 0
        %2027 = vmatprep.subr.bf16.mxu0 0
        %2028 = vmatpush1.bf16.msra.mxu0 %v2025
        %2029 = vmatprep.subr.bf16.mxu0 0
        %2030 = vmatpush1.bf16.msra.mxu0 0
        %2031 = vmatprep.subr.bf16.mxu0 0
        %2032 = vmatpush1.bf16.msra.mxu0 0
        %2033 = vmatprep.subr.bf16.mxu0 0
        %2034 = vmatpush1.bf16.msra.mxu0 0
        %2035 = vmatprep.subr.bf16.mxu0 0
        %2036 = vmatpush1.bf16.msra.mxu0 0
        %2037 = vmatprep.subr.bf16.mxu0 0
        %2038 = vmatpush1.bf16.msra.mxu0 0
        %2039 = vmatprep.subr.bf16.mxu0 0
        %2040 = vmatpush1.bf16.msra.mxu0 0
        %2041 = vmatprep.subr.bf16.mxu0 0
        %2042 = vmatpush1.bf16.msra.mxu0 0
        %2043 = vmatprep.subr.bf16.mxu0 0
        %2044 = vmatpush1.bf16.msra.mxu0 0
        %2045 = vmatprep.subr.bf16.mxu0 0
        %2046 = vmatpush1.bf16.msra.mxu0 0
        %2047 = vmatprep.subr.bf16.mxu0 0
        %2048 = vmatpush1.bf16.msra.mxu0 0
        %2049 = vmatprep.subr.bf16.mxu0 0
        %2050 = vmatpush1.bf16.msra.mxu0 0
        %2051 = vmatprep.subr.bf16.mxu0 0
        %2052 = vmatpush1.bf16.msra.mxu0 0
        %2053 = vmatprep.subr.bf16.mxu0 0
        %2054 = vmatpush1.bf16.msra.mxu0 0
        %2055 = vmatprep.subr.bf16.mxu0 0
        %2056 = vmatpush1.bf16.msra.mxu0 0
        %2057 = vmatprep.subr.bf16.mxu0 0
        %2058 = vmatpush1.bf16.msra.mxu0 0
        %2059 = vmatprep.mubr.bf16.mxu0 0
        %2060 = vmatmul.mubr.bf16.gmra.mrb[0].mxu0 %v1977
        %v2061 = vpop.f32.mrb[0].mxu0
        %v2062 = vadd.f32 0.0, %v2061
        %v2063 = vpop.f32.mrb[0].mxu0
        %v2064 = vpop.f32.mrb[0].mxu0
        %v2065 = vadd.f32 0.0, %v2064
        %v2066 = vpop.f32.mrb[0].mxu0
        %2067 = vmatprep.mubr.bf16.mxu0 0
        %2068 = vmatmul.mubr.bf16.gmra.mrb[0].mxu0 %v1980
        %v2069 = vpop.f32.mrb[0].mxu0
        %v2070 = vadd.f32 0.0, %v2069
        %v2071 = vpop.f32.mrb[0].mxu0
        %v2072 = vpop.f32.mrb[0].mxu0
        %v2073 = vadd.f32 0.0, %v2072
        %v2074 = vpop.f32.mrb[0].mxu0
        %2075 = vmatprep.mubr.bf16.mxu0 0
        %2076 = vmatmul.mubr.bf16.gmra.mrb[0].mxu0 %v1983
        %v2077 = vpop.f32.mrb[0].mxu0
        %v2078 = vadd.f32 0.0, %v2077
        %v2079 = vpop.f32.mrb[0].mxu0
        %v2080 = vpop.f32.mrb[0].mxu0
        %v2081 = vadd.f32 0.0, %v2080
        %v2082 = vpop.f32.mrb[0].mxu0
        %2083 = vmatprep.mubr.bf16.mxu0 0
        %2084 = vmatmul.mubr.bf16.gmra.mrb[0].mxu0 %v1986
        %v2085 = vpop.f32.mrb[0].mxu0
        %v2086 = vadd.f32 0.0, %v2085
        %v2087 = vpop.f32.mrb[0].mxu0
        %v2088 = vpop.f32.mrb[0].mxu0
        %v2089 = vadd.f32 0.0, %v2088
        %v2090 = vpop.f32.mrb[0].mxu0
        %2091 = vmatprep.mubr.bf16.mxu0 0
        %2092 = vmatmul.mubr.bf16.gmra.mrb[0].mxu0 %v1989
        %v2093 = vpop.f32.mrb[0].mxu0
        %v2094 = vadd.f32 0.0, %v2093
        %v2095 = vpop.f32.mrb[0].mxu0
        %v2096 = vpop.f32.mrb[0].mxu0
        %v2097 = vadd.f32 0.0, %v2096
        %v2098 = vpop.f32.mrb[0].mxu0
        %2099 = vmatprep.mubr.bf16.mxu0 0
        %2100 = vmatmul.mubr.bf16.gmra.mrb[0].mxu0 %v1992
        %v2101 = vpop.f32.mrb[0].mxu0
        %v2102 = vadd.f32 0.0, %v2101
        %v2103 = vpop.f32.mrb[0].mxu0
        %v2104 = vpop.f32.mrb[0].mxu0
        %v2105 = vadd.f32 0.0, %v2104
        %v2106 = vpop.f32.mrb[0].mxu0
        %2107 = vmatprep.mubr.bf16.mxu0 0
        %2108 = vmatmul.mubr.bf16.gmra.mrb[0].mxu0 %v1995
        %v2109 = vpop.f32.mrb[0].mxu0
        %v2110 = vadd.f32 0.0, %v2109
        %v2111 = vpop.f32.mrb[0].mxu0
        %v2112 = vpop.f32.mrb[0].mxu0
        %v2113 = vadd.f32 0.0, %v2112
        %v2114 = vpop.f32.mrb[0].mxu0
        %2115 = vmatprep.mubr.bf16.mxu0 0
        %2116 = vmatmul.mubr.bf16.gmra.mrb[0].mxu0 %v1998
        %v2117 = vpop.f32.mrb[0].mxu0
        %v2118 = vadd.f32 0.0, %v2117
        %v2119 = vpop.f32.mrb[0].mxu0
        %v2120 = vpop.f32.mrb[0].mxu0
        %v2121 = vadd.f32 0.0, %v2120
        %v2122 = vpop.f32.mrb[0].mxu0
        %2123 = vmatprep.mubr.bf16.mxu0 0
        %2124 = vmatmul.mubr.bf16.gmra.mrb[0].mxu0 %v2001
        %v2125 = vpop.f32.mrb[0].mxu0
        %v2126 = vadd.f32 0.0, %v2125
        %v2127 = vpop.f32.mrb[0].mxu0
        %v2128 = vpop.f32.mrb[0].mxu0
        %v2129 = vadd.f32 0.0, %v2128
        %v2130 = vpop.f32.mrb[0].mxu0
        %2131 = vmatprep.mubr.bf16.mxu0 0
        %2132 = vmatmul.mubr.bf16.gmra.mrb[0].mxu0 %v2004
        %v2133 = vpop.f32.mrb[0].mxu0
        %v2134 = vadd.f32 0.0, %v2133
        %v2135 = vpop.f32.mrb[0].mxu0
        %v2136 = vpop.f32.mrb[0].mxu0
        %v2137 = vadd.f32 0.0, %v2136
        %v2138 = vpop.f32.mrb[0].mxu0
        %2139 = vmatprep.mubr.bf16.mxu0 0
        %2140 = vmatmul.mubr.bf16.gmra.mrb[0].mxu0 %v2007
        %v2141 = vpop.f32.mrb[0].mxu0
        %v2142 = vadd.f32 0.0, %v2141
        %v2143 = vpop.f32.mrb[0].mxu0
        %v2144 = vpop.f32.mrb[0].mxu0
        %v2145 = vadd.f32 0.0, %v2144
        %v2146 = vpop.f32.mrb[0].mxu0
        %2147 = vmatprep.mubr.bf16.mxu0 0
        %2148 = vmatmul.mubr.bf16.gmra.mrb[0].mxu0 %v2010
        %v2149 = vpop.f32.mrb[0].mxu0
        %v2150 = vadd.f32 0.0, %v2149
        %v2151 = vpop.f32.mrb[0].mxu0
        %v2152 = vpop.f32.mrb[0].mxu0
        %v2153 = vadd.f32 0.0, %v2152
        %v2154 = vpop.f32.mrb[0].mxu0
        %2155 = vmatprep.mubr.bf16.mxu0 0
        %2156 = vmatmul.mubr.bf16.gmra.mrb[0].mxu0 %v2013
        %v2157 = vpop.f32.mrb[0].mxu0
        %v2158 = vadd.f32 0.0, %v2157
        %v2159 = vpop.f32.mrb[0].mxu0
        %v2160 = vpop.f32.mrb[0].mxu0
        %v2161 = vadd.f32 0.0, %v2160
        %v2162 = vpop.f32.mrb[0].mxu0
        %2163 = vmatprep.mubr.bf16.mxu0 0
        %2164 = vmatmul.mubr.bf16.gmra.mrb[0].mxu0 %v2016
        %v2165 = vpop.f32.mrb[0].mxu0
        %v2166 = vadd.f32 0.0, %v2165
        %v2167 = vpop.f32.mrb[0].mxu0
        %v2168 = vpop.f32.mrb[0].mxu0
        %v2169 = vadd.f32 0.0, %v2168
        %v2170 = vpop.f32.mrb[0].mxu0
        %2171 = vmatprep.mubr.bf16.mxu0 0
        %2172 = vmatmul.mubr.bf16.gmra.mrb[0].mxu0 %v2019
        %v2173 = vpop.f32.mrb[0].mxu0
        %v2174 = vadd.f32 0.0, %v2173
        %v2175 = vpop.f32.mrb[0].mxu0
        %v2176 = vpop.f32.mrb[0].mxu0
        %v2177 = vadd.f32 0.0, %v2176
        %v2178 = vpop.f32.mrb[0].mxu0
        %2179 = vmatprep.mubr.bf16.mxu0 0
        %2180 = vmatmul.mubr.bf16.gmra.mrb[0].mxu0 %v2022
        %v2181 = vpop.f32.mrb[0].mxu0
        %v2182 = vadd.f32 0.0, %v2181
        %v2183 = vpop.f32.mrb[0].mxu0
        %v2184 = vpop.f32.mrb[0].mxu0
        %v2185 = vadd.f32 0.0, %v2184
        %v2186 = vpop.f32.mrb[0].mxu0
        %2187 = vdwg.mxu0
        %v2188 = vadd.f32 %v1893, %v2062
        %v2189 = vadd.f32 %v1894, %v2065
        %v2190 = vadd.f32 %v1895, %v2070
        %v2191 = vadd.f32 %v1896, %v2073
        %v2192 = vadd.f32 %v1897, %v2078
        %v2193 = vadd.f32 %v1898, %v2081
        %v2194 = vadd.f32 %v1899, %v2086
        %v2195 = vadd.f32 %v1900, %v2089
        %v2196 = vadd.f32 %v1901, %v2094
        %v2197 = vadd.f32 %v1902, %v2097
        %v2198 = vadd.f32 %v1903, %v2102
        %v2199 = vadd.f32 %v1904, %v2105
        %v2200 = vadd.f32 %v1905, %v2110
        %v2201 = vadd.f32 %v1906, %v2113
        %v2202 = vadd.f32 %v1907, %v2118
        %v2203 = vadd.f32 %v1908, %v2121
        %v2204 = vadd.f32 %v1909, %v2126
        %v2205 = vadd.f32 %v1910, %v2129
        %v2206 = vadd.f32 %v1911, %v2134
        %v2207 = vadd.f32 %v1912, %v2137
        %v2208 = vadd.f32 %v1913, %v2142
        %v2209 = vadd.f32 %v1914, %v2145
        %v2210 = vadd.f32 %v1915, %v2150
        %v2211 = vadd.f32 %v1916, %v2153
        %v2212 = vadd.f32 %v1917, %v2158
        %v2213 = vadd.f32 %v1918, %v2161
        %v2214 = vadd.f32 %v1919, %v2166
        %v2215 = vadd.f32 %v1920, %v2169
        %v2216 = vadd.f32 %v1921, %v2174
        %v2217 = vadd.f32 %v1922, %v2177
        %v2218 = vadd.f32 %v1923, %v2182
        %v2219 = vadd.f32 %v1924, %v2185
        %v2220 = vld [vmem:[%s1925 + $0x1] sm:$0xff]
        %v2221 = vld [vmem:[%s1925 + $0x9] sm:$0xff]
        %v2222 = vld [vmem:[%s1925 + $0x19] sm:$0xff]
        %v2223 = vld [vmem:[%s1925 + $0x21] sm:$0xff]
        %v2224 = vld [vmem:[%s1925 + $0x31] sm:$0xff]
        %v2225 = vld [vmem:[%s1925 + $0x39] sm:$0xff]
        %v2226 = vld [vmem:[%s1925 + $0x49] sm:$0xff]
        %v2227 = vld [vmem:[%s1925 + $0x51] sm:$0xff]
        %v2228 = vld [vmem:[%s1925 + $0x61] sm:$0xff]
        %v2229 = vld [vmem:[%s1925 + $0x69] sm:$0xff]
        %v2230 = vld [vmem:[%s1925 + $0x79] sm:$0xff]
        %v2231 = vld [vmem:[%s1925 + $0x81] sm:$0xff]
        %v2232 = vld [vmem:[%s1925 + $0x91] sm:$0xff]
        %v2233 = vld [vmem:[%s1925 + $0x99] sm:$0xff]
        %v2234 = vld [vmem:[%s1925 + $0xa9] sm:$0xff]
        %v2235 = vld [vmem:[%s1925 + $0xb1] sm:$0xff]
        %v2236 = vld [vmem:[%s1925 + $0xc1] sm:$0xff]
        %v2237 = vld [vmem:[%s1925 + $0xc9] sm:$0xff]
        %v2238 = vld [vmem:[%s1925 + $0xd9] sm:$0xff]
        %v2239 = vld [vmem:[%s1925 + $0xe1] sm:$0xff]
        %v2240 = vld [vmem:[%s1925 + $0xf1] sm:$0xff]
        %v2241 = vld [vmem:[%s1925 + $0xf9] sm:$0xff]
        %v2242 = vld [vmem:[%s1925 + $0x109] sm:$0xff]
        %v2243 = vld [vmem:[%s1925 + $0x111] sm:$0xff]
        %v2244 = vld [vmem:[%s1925 + $0x121] sm:$0xff]
        %v2245 = vld [vmem:[%s1925 + $0x129] sm:$0xff]
        %v2246 = vld [vmem:[%s1925 + $0x139] sm:$0xff]
        %v2247 = vld [vmem:[%s1925 + $0x141] sm:$0xff]
        %v2248 = vld [vmem:[%s1925 + $0x151] sm:$0xff]
        %v2249 = vld [vmem:[%s1925 + $0x159] sm:$0xff]
        %v2250 = vld [vmem:[%s1925 + $0x169] sm:$0xff]
        %v2251 = vld [vmem:[%s1925 + $0x171] sm:$0xff]
        %v2252 = vpack.c.bf16 %v2221, %v2220
        %v2253 = vpack.c.bf16 %v2223, %v2222
        %v2254 = vpack.c.bf16 %v2225, %v2224
        %v2255 = vpack.c.bf16 %v2227, %v2226
        %v2256 = vpack.c.bf16 %v2229, %v2228
        %v2257 = vpack.c.bf16 %v2231, %v2230
        %v2258 = vpack.c.bf16 %v2233, %v2232
        %v2259 = vpack.c.bf16 %v2235, %v2234
        %v2260 = vpack.c.bf16 %v2237, %v2236
        %v2261 = vpack.c.bf16 %v2239, %v2238
        %v2262 = vpack.c.bf16 %v2241, %v2240
        %v2263 = vpack.c.bf16 %v2243, %v2242
        %v2264 = vpack.c.bf16 %v2245, %v2244
        %v2265 = vpack.c.bf16 %v2247, %v2246
        %v2266 = vpack.c.bf16 %v2249, %v2248
        %v2267 = vpack.c.bf16 %v2251, %v2250
        %s2268 = scalar_lea.vmem %s1, 14
        %v2269 = vld [vmem:[%s2268] sm:$0x3]
        %v2271 = vsel %vm322, %v2252, 0
        %v2274 = vsel %vm322, %v2253, 0
        %v2277 = vsel %vm322, %v2254, 0
        %v2280 = vsel %vm322, %v2255, 0
        %v2283 = vsel %vm322, %v2256, 0
        %v2286 = vsel %vm322, %v2257, 0
        %v2289 = vsel %vm322, %v2258, 0
        %v2292 = vsel %vm322, %v2259, 0
        %v2295 = vsel %vm322, %v2260, 0
        %v2298 = vsel %vm322, %v2261, 0
        %v2301 = vsel %vm322, %v2262, 0
        %v2304 = vsel %vm322, %v2263, 0
        %v2307 = vsel %vm322, %v2264, 0
        %v2310 = vsel %vm322, %v2265, 0
        %v2313 = vsel %vm322, %v2266, 0
        %v2316 = vsel %vm322, %v2267, 0
        %v2319 = vsel %vm371, %v2269, 0
        %2321 = vmatprep.subr.bf16.mxu0 0
        %2322 = vmatpush1.bf16.msra.mxu0 %v2319
        %2323 = vmatprep.subr.bf16.mxu0 0
        %2324 = vmatpush1.bf16.msra.mxu0 0
        %2325 = vmatprep.subr.bf16.mxu0 0
        %2326 = vmatpush1.bf16.msra.mxu0 0
        %2327 = vmatprep.subr.bf16.mxu0 0
        %2328 = vmatpush1.bf16.msra.mxu0 0
        %2329 = vmatprep.subr.bf16.mxu0 0
        %2330 = vmatpush1.bf16.msra.mxu0 0
        %2331 = vmatprep.subr.bf16.mxu0 0
        %2332 = vmatpush1.bf16.msra.mxu0 0
        %2333 = vmatprep.subr.bf16.mxu0 0
        %2334 = vmatpush1.bf16.msra.mxu0 0
        %2335 = vmatprep.subr.bf16.mxu0 0
        %2336 = vmatpush1.bf16.msra.mxu0 0
        %2337 = vmatprep.subr.bf16.mxu0 0
        %2338 = vmatpush1.bf16.msra.mxu0 0
        %2339 = vmatprep.subr.bf16.mxu0 0
        %2340 = vmatpush1.bf16.msra.mxu0 0
        %2341 = vmatprep.subr.bf16.mxu0 0
        %2342 = vmatpush1.bf16.msra.mxu0 0
        %2343 = vmatprep.subr.bf16.mxu0 0
        %2344 = vmatpush1.bf16.msra.mxu0 0
        %2345 = vmatprep.subr.bf16.mxu0 0
        %2346 = vmatpush1.bf16.msra.mxu0 0
        %2347 = vmatprep.subr.bf16.mxu0 0
        %2348 = vmatpush1.bf16.msra.mxu0 0
        %2349 = vmatprep.subr.bf16.mxu0 0
        %2350 = vmatpush1.bf16.msra.mxu0 0
        %2351 = vmatprep.subr.bf16.mxu0 0
        %2352 = vmatpush1.bf16.msra.mxu0 0
        %2353 = vmatprep.mubr.bf16.mxu0 0
        %2354 = vmatmul.mubr.bf16.gmra.mrb[0].mxu0 %v2271
        %v2355 = vpop.f32.mrb[0].mxu0
        %v2356 = vadd.f32 0.0, %v2355
        %v2357 = vpop.f32.mrb[0].mxu0
        %v2358 = vpop.f32.mrb[0].mxu0
        %v2359 = vadd.f32 0.0, %v2358
        %v2360 = vpop.f32.mrb[0].mxu0
        %2361 = vmatprep.mubr.bf16.mxu0 0
        %2362 = vmatmul.mubr.bf16.gmra.mrb[0].mxu0 %v2274
        %v2363 = vpop.f32.mrb[0].mxu0
        %v2364 = vadd.f32 0.0, %v2363
        %v2365 = vpop.f32.mrb[0].mxu0
        %v2366 = vpop.f32.mrb[0].mxu0
        %v2367 = vadd.f32 0.0, %v2366
        %v2368 = vpop.f32.mrb[0].mxu0
        %2369 = vmatprep.mubr.bf16.mxu0 0
        %2370 = vmatmul.mubr.bf16.gmra.mrb[0].mxu0 %v2277
        %v2371 = vpop.f32.mrb[0].mxu0
        %v2372 = vadd.f32 0.0, %v2371
        %v2373 = vpop.f32.mrb[0].mxu0
        %v2374 = vpop.f32.mrb[0].mxu0
        %v2375 = vadd.f32 0.0, %v2374
        %v2376 = vpop.f32.mrb[0].mxu0
        %2377 = vmatprep.mubr.bf16.mxu0 0
        %2378 = vmatmul.mubr.bf16.gmra.mrb[0].mxu0 %v2280
        %v2379 = vpop.f32.mrb[0].mxu0
        %v2380 = vadd.f32 0.0, %v2379
        %v2381 = vpop.f32.mrb[0].mxu0
        %v2382 = vpop.f32.mrb[0].mxu0
        %v2383 = vadd.f32 0.0, %v2382
        %v2384 = vpop.f32.mrb[0].mxu0
        %2385 = vmatprep.mubr.bf16.mxu0 0
        %2386 = vmatmul.mubr.bf16.gmra.mrb[0].mxu0 %v2283
        %v2387 = vpop.f32.mrb[0].mxu0
        %v2388 = vadd.f32 0.0, %v2387
        %v2389 = vpop.f32.mrb[0].mxu0
        %v2390 = vpop.f32.mrb[0].mxu0
        %v2391 = vadd.f32 0.0, %v2390
        %v2392 = vpop.f32.mrb[0].mxu0
        %2393 = vmatprep.mubr.bf16.mxu0 0
        %2394 = vmatmul.mubr.bf16.gmra.mrb[0].mxu0 %v2286
        %v2395 = vpop.f32.mrb[0].mxu0
        %v2396 = vadd.f32 0.0, %v2395
        %v2397 = vpop.f32.mrb[0].mxu0
        %v2398 = vpop.f32.mrb[0].mxu0
        %v2399 = vadd.f32 0.0, %v2398
        %v2400 = vpop.f32.mrb[0].mxu0
        %2401 = vmatprep.mubr.bf16.mxu0 0
        %2402 = vmatmul.mubr.bf16.gmra.mrb[0].mxu0 %v2289
        %v2403 = vpop.f32.mrb[0].mxu0
        %v2404 = vadd.f32 0.0, %v2403
        %v2405 = vpop.f32.mrb[0].mxu0
        %v2406 = vpop.f32.mrb[0].mxu0
        %v2407 = vadd.f32 0.0, %v2406
        %v2408 = vpop.f32.mrb[0].mxu0
        %2409 = vmatprep.mubr.bf16.mxu0 0
        %2410 = vmatmul.mubr.bf16.gmra.mrb[0].mxu0 %v2292
        %v2411 = vpop.f32.mrb[0].mxu0
        %v2412 = vadd.f32 0.0, %v2411
        %v2413 = vpop.f32.mrb[0].mxu0
        %v2414 = vpop.f32.mrb[0].mxu0
        %v2415 = vadd.f32 0.0, %v2414
        %v2416 = vpop.f32.mrb[0].mxu0
        %2417 = vmatprep.mubr.bf16.mxu0 0
        %2418 = vmatmul.mubr.bf16.gmra.mrb[0].mxu0 %v2295
        %v2419 = vpop.f32.mrb[0].mxu0
        %v2420 = vadd.f32 0.0, %v2419
        %v2421 = vpop.f32.mrb[0].mxu0
        %v2422 = vpop.f32.mrb[0].mxu0
        %v2423 = vadd.f32 0.0, %v2422
        %v2424 = vpop.f32.mrb[0].mxu0
        %2425 = vmatprep.mubr.bf16.mxu0 0
        %2426 = vmatmul.mubr.bf16.gmra.mrb[0].mxu0 %v2298
        %v2427 = vpop.f32.mrb[0].mxu0
        %v2428 = vadd.f32 0.0, %v2427
        %v2429 = vpop.f32.mrb[0].mxu0
        %v2430 = vpop.f32.mrb[0].mxu0
        %v2431 = vadd.f32 0.0, %v2430
        %v2432 = vpop.f32.mrb[0].mxu0
        %2433 = vmatprep.mubr.bf16.mxu0 0
        %2434 = vmatmul.mubr.bf16.gmra.mrb[0].mxu0 %v2301
        %v2435 = vpop.f32.mrb[0].mxu0
        %v2436 = vadd.f32 0.0, %v2435
        %v2437 = vpop.f32.mrb[0].mxu0
        %v2438 = vpop.f32.mrb[0].mxu0
        %v2439 = vadd.f32 0.0, %v2438
        %v2440 = vpop.f32.mrb[0].mxu0
        %2441 = vmatprep.mubr.bf16.mxu0 0
        %2442 = vmatmul.mubr.bf16.gmra.mrb[0].mxu0 %v2304
        %v2443 = vpop.f32.mrb[0].mxu0
        %v2444 = vadd.f32 0.0, %v2443
        %v2445 = vpop.f32.mrb[0].mxu0
        %v2446 = vpop.f32.mrb[0].mxu0
        %v2447 = vadd.f32 0.0, %v2446
        %v2448 = vpop.f32.mrb[0].mxu0
        %2449 = vmatprep.mubr.bf16.mxu0 0
        %2450 = vmatmul.mubr.bf16.gmra.mrb[0].mxu0 %v2307
        %v2451 = vpop.f32.mrb[0].mxu0
        %v2452 = vadd.f32 0.0, %v2451
        %v2453 = vpop.f32.mrb[0].mxu0
        %v2454 = vpop.f32.mrb[0].mxu0
        %v2455 = vadd.f32 0.0, %v2454
        %v2456 = vpop.f32.mrb[0].mxu0
        %2457 = vmatprep.mubr.bf16.mxu0 0
        %2458 = vmatmul.mubr.bf16.gmra.mrb[0].mxu0 %v2310
        %v2459 = vpop.f32.mrb[0].mxu0
        %v2460 = vadd.f32 0.0, %v2459
        %v2461 = vpop.f32.mrb[0].mxu0
        %v2462 = vpop.f32.mrb[0].mxu0
        %v2463 = vadd.f32 0.0, %v2462
        %v2464 = vpop.f32.mrb[0].mxu0
        %2465 = vmatprep.mubr.bf16.mxu0 0
        %2466 = vmatmul.mubr.bf16.gmra.mrb[0].mxu0 %v2313
        %v2467 = vpop.f32.mrb[0].mxu0
        %v2468 = vadd.f32 0.0, %v2467
        %v2469 = vpop.f32.mrb[0].mxu0
        %v2470 = vpop.f32.mrb[0].mxu0
        %v2471 = vadd.f32 0.0, %v2470
        %v2472 = vpop.f32.mrb[0].mxu0
        %2473 = vmatprep.mubr.bf16.mxu0 0
        %2474 = vmatmul.mubr.bf16.gmra.mrb[0].mxu0 %v2316
        %v2475 = vpop.f32.mrb[0].mxu0
        %v2476 = vadd.f32 0.0, %v2475
        %v2477 = vpop.f32.mrb[0].mxu0
        %v2478 = vpop.f32.mrb[0].mxu0
        %v2479 = vadd.f32 0.0, %v2478
        %v2480 = vpop.f32.mrb[0].mxu0
        %2481 = vdwg.mxu0
        %v2482 = vadd.f32 %v2188, %v2356
        %v2483 = vadd.f32 %v2189, %v2359
        %v2484 = vadd.f32 %v2190, %v2364
        %v2485 = vadd.f32 %v2191, %v2367
        %v2486 = vadd.f32 %v2192, %v2372
        %v2487 = vadd.f32 %v2193, %v2375
        %v2488 = vadd.f32 %v2194, %v2380
        %v2489 = vadd.f32 %v2195, %v2383
        %v2490 = vadd.f32 %v2196, %v2388
        %v2491 = vadd.f32 %v2197, %v2391
        %v2492 = vadd.f32 %v2198, %v2396
        %v2493 = vadd.f32 %v2199, %v2399
        %v2494 = vadd.f32 %v2200, %v2404
        %v2495 = vadd.f32 %v2201, %v2407
        %v2496 = vadd.f32 %v2202, %v2412
        %v2497 = vadd.f32 %v2203, %v2415
        %v2498 = vadd.f32 %v2204, %v2420
        %v2499 = vadd.f32 %v2205, %v2423
        %v2500 = vadd.f32 %v2206, %v2428
        %v2501 = vadd.f32 %v2207, %v2431
        %v2502 = vadd.f32 %v2208, %v2436
        %v2503 = vadd.f32 %v2209, %v2439
        %v2504 = vadd.f32 %v2210, %v2444
        %v2505 = vadd.f32 %v2211, %v2447
        %v2506 = vadd.f32 %v2212, %v2452
        %v2507 = vadd.f32 %v2213, %v2455
        %v2508 = vadd.f32 %v2214, %v2460
        %v2509 = vadd.f32 %v2215, %v2463
        %v2510 = vadd.f32 %v2216, %v2468
        %v2511 = vadd.f32 %v2217, %v2471
        %v2512 = vadd.f32 %v2218, %v2476
        %v2513 = vadd.f32 %v2219, %v2479
        %v2514 = vld [vmem:[%s1925 + $0x2] sm:$0xff]
        %v2515 = vld [vmem:[%s1925 + $0xa] sm:$0xff]
        %v2516 = vld [vmem:[%s1925 + $0x1a] sm:$0xff]
        %v2517 = vld [vmem:[%s1925 + $0x22] sm:$0xff]
        %v2518 = vld [vmem:[%s1925 + $0x32] sm:$0xff]
        %v2519 = vld [vmem:[%s1925 + $0x3a] sm:$0xff]
        %v2520 = vld [vmem:[%s1925 + $0x4a] sm:$0xff]
        %v2521 = vld [vmem:[%s1925 + $0x52] sm:$0xff]
        %v2522 = vld [vmem:[%s1925 + $0x62] sm:$0xff]
        %v2523 = vld [vmem:[%s1925 + $0x6a] sm:$0xff]
        %v2524 = vld [vmem:[%s1925 + $0x7a] sm:$0xff]
        %v2525 = vld [vmem:[%s1925 + $0x82] sm:$0xff]
        %v2526 = vld [vmem:[%s1925 + $0x92] sm:$0xff]
        %v2527 = vld [vmem:[%s1925 + $0x9a] sm:$0xff]
        %v2528 = vld [vmem:[%s1925 + $0xaa] sm:$0xff]
        %v2529 = vld [vmem:[%s1925 + $0xb2] sm:$0xff]
        %v2530 = vld [vmem:[%s1925 + $0xc2] sm:$0xff]
        %v2531 = vld [vmem:[%s1925 + $0xca] sm:$0xff]
        %v2532 = vld [vmem:[%s1925 + $0xda] sm:$0xff]
        %v2533 = vld [vmem:[%s1925 + $0xe2] sm:$0xff]
        %v2534 = vld [vmem:[%s1925 + $0xf2] sm:$0xff]
        %v2535 = vld [vmem:[%s1925 + $0xfa] sm:$0xff]
        %v2536 = vld [vmem:[%s1925 + $0x10a] sm:$0xff]
        %v2537 = vld [vmem:[%s1925 + $0x112] sm:$0xff]
        %v2538 = vld [vmem:[%s1925 + $0x122] sm:$0xff]
        %v2539 = vld [vmem:[%s1925 + $0x12a] sm:$0xff]
        %v2540 = vld [vmem:[%s1925 + $0x13a] sm:$0xff]
        %v2541 = vld [vmem:[%s1925 + $0x142] sm:$0xff]
        %v2542 = vld [vmem:[%s1925 + $0x152] sm:$0xff]
        %v2543 = vld [vmem:[%s1925 + $0x15a] sm:$0xff]
        %v2544 = vld [vmem:[%s1925 + $0x16a] sm:$0xff]
        %v2545 = vld [vmem:[%s1925 + $0x172] sm:$0xff]
        %v2546 = vpack.c.bf16 %v2515, %v2514
        %v2547 = vpack.c.bf16 %v2517, %v2516
        %v2548 = vpack.c.bf16 %v2519, %v2518
        %v2549 = vpack.c.bf16 %v2521, %v2520
        %v2550 = vpack.c.bf16 %v2523, %v2522
        %v2551 = vpack.c.bf16 %v2525, %v2524
        %v2552 = vpack.c.bf16 %v2527, %v2526
        %v2553 = vpack.c.bf16 %v2529, %v2528
        %v2554 = vpack.c.bf16 %v2531, %v2530
        %v2555 = vpack.c.bf16 %v2533, %v2532
        %v2556 = vpack.c.bf16 %v2535, %v2534
        %v2557 = vpack.c.bf16 %v2537, %v2536
        %v2558 = vpack.c.bf16 %v2539, %v2538
        %v2559 = vpack.c.bf16 %v2541, %v2540
        %v2560 = vpack.c.bf16 %v2543, %v2542
        %v2561 = vpack.c.bf16 %v2545, %v2544
        %s2562 = scalar_lea.vmem %s1, 16
        %v2563 = vld [vmem:[%s2562] sm:$0x3]
        %v2565 = vsel %vm322, %v2546, 0
        %v2568 = vsel %vm322, %v2547, 0
        %v2571 = vsel %vm322, %v2548, 0
        %v2574 = vsel %vm322, %v2549, 0
        %v2577 = vsel %vm322, %v2550, 0
        %v2580 = vsel %vm322, %v2551, 0
        %v2583 = vsel %vm322, %v2552, 0
        %v2586 = vsel %vm322, %v2553, 0
        %v2589 = vsel %vm322, %v2554, 0
        %v2592 = vsel %vm322, %v2555, 0
        %v2595 = vsel %vm322, %v2556, 0
        %v2598 = vsel %vm322, %v2557, 0
        %v2601 = vsel %vm322, %v2558, 0
        %v2604 = vsel %vm322, %v2559, 0
        %v2607 = vsel %vm322, %v2560, 0
        %v2610 = vsel %vm322, %v2561, 0
        %v2613 = vsel %vm371, %v2563, 0
        %2615 = vmatprep.subr.bf16.mxu0 0
        %2616 = vmatpush1.bf16.msra.mxu0 %v2613
        %2617 = vmatprep.subr.bf16.mxu0 0
        %2618 = vmatpush1.bf16.msra.mxu0 0
        %2619 = vmatprep.subr.bf16.mxu0 0
        %2620 = vmatpush1.bf16.msra.mxu0 0
        %2621 = vmatprep.subr.bf16.mxu0 0
        %2622 = vmatpush1.bf16.msra.mxu0 0
        %2623 = vmatprep.subr.bf16.mxu0 0
        %2624 = vmatpush1.bf16.msra.mxu0 0
        %2625 = vmatprep.subr.bf16.mxu0 0
        %2626 = vmatpush1.bf16.msra.mxu0 0
        %2627 = vmatprep.subr.bf16.mxu0 0
        %2628 = vmatpush1.bf16.msra.mxu0 0
        %2629 = vmatprep.subr.bf16.mxu0 0
        %2630 = vmatpush1.bf16.msra.mxu0 0
        %2631 = vmatprep.subr.bf16.mxu0 0
        %2632 = vmatpush1.bf16.msra.mxu0 0
        %2633 = vmatprep.subr.bf16.mxu0 0
        %2634 = vmatpush1.bf16.msra.mxu0 0
        %2635 = vmatprep.subr.bf16.mxu0 0
        %2636 = vmatpush1.bf16.msra.mxu0 0
        %2637 = vmatprep.subr.bf16.mxu0 0
        %2638 = vmatpush1.bf16.msra.mxu0 0
        %2639 = vmatprep.subr.bf16.mxu0 0
        %2640 = vmatpush1.bf16.msra.mxu0 0
        %2641 = vmatprep.subr.bf16.mxu0 0
        %2642 = vmatpush1.bf16.msra.mxu0 0
        %2643 = vmatprep.subr.bf16.mxu0 0
        %2644 = vmatpush1.bf16.msra.mxu0 0
        %2645 = vmatprep.subr.bf16.mxu0 0
        %2646 = vmatpush1.bf16.msra.mxu0 0
        %2647 = vmatprep.mubr.bf16.mxu0 0
        %2648 = vmatmul.mubr.bf16.gmra.mrb[0].mxu0 %v2565
        %v2649 = vpop.f32.mrb[0].mxu0
        %v2650 = vadd.f32 0.0, %v2649
        %v2651 = vpop.f32.mrb[0].mxu0
        %v2652 = vpop.f32.mrb[0].mxu0
        %v2653 = vadd.f32 0.0, %v2652
        %v2654 = vpop.f32.mrb[0].mxu0
        %2655 = vmatprep.mubr.bf16.mxu0 0
        %2656 = vmatmul.mubr.bf16.gmra.mrb[0].mxu0 %v2568
        %v2657 = vpop.f32.mrb[0].mxu0
        %v2658 = vadd.f32 0.0, %v2657
        %v2659 = vpop.f32.mrb[0].mxu0
        %v2660 = vpop.f32.mrb[0].mxu0
        %v2661 = vadd.f32 0.0, %v2660
        %v2662 = vpop.f32.mrb[0].mxu0
        %2663 = vmatprep.mubr.bf16.mxu0 0
        %2664 = vmatmul.mubr.bf16.gmra.mrb[0].mxu0 %v2571
        %v2665 = vpop.f32.mrb[0].mxu0
        %v2666 = vadd.f32 0.0, %v2665
        %v2667 = vpop.f32.mrb[0].mxu0
        %v2668 = vpop.f32.mrb[0].mxu0
        %v2669 = vadd.f32 0.0, %v2668
        %v2670 = vpop.f32.mrb[0].mxu0
        %2671 = vmatprep.mubr.bf16.mxu0 0
        %2672 = vmatmul.mubr.bf16.gmra.mrb[0].mxu0 %v2574
        %v2673 = vpop.f32.mrb[0].mxu0
        %v2674 = vadd.f32 0.0, %v2673
        %v2675 = vpop.f32.mrb[0].mxu0
        %v2676 = vpop.f32.mrb[0].mxu0
        %v2677 = vadd.f32 0.0, %v2676
        %v2678 = vpop.f32.mrb[0].mxu0
        %2679 = vmatprep.mubr.bf16.mxu0 0
        %2680 = vmatmul.mubr.bf16.gmra.mrb[0].mxu0 %v2577
        %v2681 = vpop.f32.mrb[0].mxu0
        %v2682 = vadd.f32 0.0, %v2681
        %v2683 = vpop.f32.mrb[0].mxu0
        %v2684 = vpop.f32.mrb[0].mxu0
        %v2685 = vadd.f32 0.0, %v2684
        %v2686 = vpop.f32.mrb[0].mxu0
        %2687 = vmatprep.mubr.bf16.mxu0 0
        %2688 = vmatmul.mubr.bf16.gmra.mrb[0].mxu0 %v2580
        %v2689 = vpop.f32.mrb[0].mxu0
        %v2690 = vadd.f32 0.0, %v2689
        %v2691 = vpop.f32.mrb[0].mxu0
        %v2692 = vpop.f32.mrb[0].mxu0
        %v2693 = vadd.f32 0.0, %v2692
        %v2694 = vpop.f32.mrb[0].mxu0
        %2695 = vmatprep.mubr.bf16.mxu0 0
        %2696 = vmatmul.mubr.bf16.gmra.mrb[0].mxu0 %v2583
        %v2697 = vpop.f32.mrb[0].mxu0
        %v2698 = vadd.f32 0.0, %v2697
        %v2699 = vpop.f32.mrb[0].mxu0
        %v2700 = vpop.f32.mrb[0].mxu0
        %v2701 = vadd.f32 0.0, %v2700
        %v2702 = vpop.f32.mrb[0].mxu0
        %2703 = vmatprep.mubr.bf16.mxu0 0
        %2704 = vmatmul.mubr.bf16.gmra.mrb[0].mxu0 %v2586
        %v2705 = vpop.f32.mrb[0].mxu0
        %v2706 = vadd.f32 0.0, %v2705
        %v2707 = vpop.f32.mrb[0].mxu0
        %v2708 = vpop.f32.mrb[0].mxu0
        %v2709 = vadd.f32 0.0, %v2708
        %v2710 = vpop.f32.mrb[0].mxu0
        %2711 = vmatprep.mubr.bf16.mxu0 0
        %2712 = vmatmul.mubr.bf16.gmra.mrb[0].mxu0 %v2589
        %v2713 = vpop.f32.mrb[0].mxu0
        %v2714 = vadd.f32 0.0, %v2713
        %v2715 = vpop.f32.mrb[0].mxu0
        %v2716 = vpop.f32.mrb[0].mxu0
        %v2717 = vadd.f32 0.0, %v2716
        %v2718 = vpop.f32.mrb[0].mxu0
        %2719 = vmatprep.mubr.bf16.mxu0 0
        %2720 = vmatmul.mubr.bf16.gmra.mrb[0].mxu0 %v2592
        %v2721 = vpop.f32.mrb[0].mxu0
        %v2722 = vadd.f32 0.0, %v2721
        %v2723 = vpop.f32.mrb[0].mxu0
        %v2724 = vpop.f32.mrb[0].mxu0
        %v2725 = vadd.f32 0.0, %v2724
        %v2726 = vpop.f32.mrb[0].mxu0
        %2727 = vmatprep.mubr.bf16.mxu0 0
        %2728 = vmatmul.mubr.bf16.gmra.mrb[0].mxu0 %v2595
        %v2729 = vpop.f32.mrb[0].mxu0
        %v2730 = vadd.f32 0.0, %v2729
        %v2731 = vpop.f32.mrb[0].mxu0
        %v2732 = vpop.f32.mrb[0].mxu0
        %v2733 = vadd.f32 0.0, %v2732
        %v2734 = vpop.f32.mrb[0].mxu0
        %2735 = vmatprep.mubr.bf16.mxu0 0
        %2736 = vmatmul.mubr.bf16.gmra.mrb[0].mxu0 %v2598
        %v2737 = vpop.f32.mrb[0].mxu0
        %v2738 = vadd.f32 0.0, %v2737
        %v2739 = vpop.f32.mrb[0].mxu0
        %v2740 = vpop.f32.mrb[0].mxu0
        %v2741 = vadd.f32 0.0, %v2740
        %v2742 = vpop.f32.mrb[0].mxu0
        %2743 = vmatprep.mubr.bf16.mxu0 0
        %2744 = vmatmul.mubr.bf16.gmra.mrb[0].mxu0 %v2601
        %v2745 = vpop.f32.mrb[0].mxu0
        %v2746 = vadd.f32 0.0, %v2745
        %v2747 = vpop.f32.mrb[0].mxu0
        %v2748 = vpop.f32.mrb[0].mxu0
        %v2749 = vadd.f32 0.0, %v2748
        %v2750 = vpop.f32.mrb[0].mxu0
        %2751 = vmatprep.mubr.bf16.mxu0 0
        %2752 = vmatmul.mubr.bf16.gmra.mrb[0].mxu0 %v2604
        %v2753 = vpop.f32.mrb[0].mxu0
        %v2754 = vadd.f32 0.0, %v2753
        %v2755 = vpop.f32.mrb[0].mxu0
        %v2756 = vpop.f32.mrb[0].mxu0
        %v2757 = vadd.f32 0.0, %v2756
        %v2758 = vpop.f32.mrb[0].mxu0
        %2759 = vmatprep.mubr.bf16.mxu0 0
        %2760 = vmatmul.mubr.bf16.gmra.mrb[0].mxu0 %v2607
        %v2761 = vpop.f32.mrb[0].mxu0
        %v2762 = vadd.f32 0.0, %v2761
        %v2763 = vpop.f32.mrb[0].mxu0
        %v2764 = vpop.f32.mrb[0].mxu0
        %v2765 = vadd.f32 0.0, %v2764
        %v2766 = vpop.f32.mrb[0].mxu0
        %2767 = vmatprep.mubr.bf16.mxu0 0
        %2768 = vmatmul.mubr.bf16.gmra.mrb[0].mxu0 %v2610
        %v2769 = vpop.f32.mrb[0].mxu0
        %v2770 = vadd.f32 0.0, %v2769
        %v2771 = vpop.f32.mrb[0].mxu0
        %v2772 = vpop.f32.mrb[0].mxu0
        %v2773 = vadd.f32 0.0, %v2772
        %v2774 = vpop.f32.mrb[0].mxu0
        %2775 = vdwg.mxu0
        %v2776 = vadd.f32 %v2482, %v2650
        %v2777 = vadd.f32 %v2483, %v2653
        %v2778 = vadd.f32 %v2484, %v2658
        %v2779 = vadd.f32 %v2485, %v2661
        %v2780 = vadd.f32 %v2486, %v2666
        %v2781 = vadd.f32 %v2487, %v2669
        %v2782 = vadd.f32 %v2488, %v2674
        %v2783 = vadd.f32 %v2489, %v2677
        %v2784 = vadd.f32 %v2490, %v2682
        %v2785 = vadd.f32 %v2491, %v2685
        %v2786 = vadd.f32 %v2492, %v2690
        %v2787 = vadd.f32 %v2493, %v2693
        %v2788 = vadd.f32 %v2494, %v2698
        %v2789 = vadd.f32 %v2495, %v2701
        %v2790 = vadd.f32 %v2496, %v2706
        %v2791 = vadd.f32 %v2497, %v2709
        %v2792 = vadd.f32 %v2498, %v2714
        %v2793 = vadd.f32 %v2499, %v2717
        %v2794 = vadd.f32 %v2500, %v2722
        %v2795 = vadd.f32 %v2501, %v2725
        %v2796 = vadd.f32 %v2502, %v2730
        %v2797 = vadd.f32 %v2503, %v2733
        %v2798 = vadd.f32 %v2504, %v2738
        %v2799 = vadd.f32 %v2505, %v2741
        %v2800 = vadd.f32 %v2506, %v2746
        %v2801 = vadd.f32 %v2507, %v2749
        %v2802 = vadd.f32 %v2508, %v2754
        %v2803 = vadd.f32 %v2509, %v2757
        %v2804 = vadd.f32 %v2510, %v2762
        %v2805 = vadd.f32 %v2511, %v2765
        %v2806 = vadd.f32 %v2512, %v2770
        %v2807 = vadd.f32 %v2513, %v2773
        %v2808 = vld [vmem:[%s2] sm:$0x1]
        %v2810 = vlaneseq
        %v2811 = vshrl.u32 %v2810, 7
        %v2812 = vsub.s32 0, %v2811
        %v2813 = vrot.slane %v2808, %v2812
        %v2815 = vadd.f32 %v2776, %v2813
        %v2816 = vadd.f32 %v2777, %v2813
        %v2817 = vadd.f32 %v2778, %v2813
        %v2818 = vadd.f32 %v2779, %v2813
        %v2819 = vadd.f32 %v2780, %v2813
        %v2820 = vadd.f32 %v2781, %v2813
        %v2821 = vadd.f32 %v2782, %v2813
        %v2822 = vadd.f32 %v2783, %v2813
        %v2823 = vadd.f32 %v2784, %v2813
        %v2824 = vadd.f32 %v2785, %v2813
        %v2825 = vadd.f32 %v2786, %v2813
        %v2826 = vadd.f32 %v2787, %v2813
        %v2827 = vadd.f32 %v2788, %v2813
        %v2828 = vadd.f32 %v2789, %v2813
        %v2829 = vadd.f32 %v2790, %v2813
        %v2830 = vadd.f32 %v2791, %v2813
        %v2831 = vadd.f32 %v2792, %v2813
        %v2832 = vadd.f32 %v2793, %v2813
        %v2833 = vadd.f32 %v2794, %v2813
        %v2834 = vadd.f32 %v2795, %v2813
        %v2835 = vadd.f32 %v2796, %v2813
        %v2836 = vadd.f32 %v2797, %v2813
        %v2837 = vadd.f32 %v2798, %v2813
        %v2838 = vadd.f32 %v2799, %v2813
        %v2839 = vadd.f32 %v2800, %v2813
        %v2840 = vadd.f32 %v2801, %v2813
        %v2841 = vadd.f32 %v2802, %v2813
        %v2842 = vadd.f32 %v2803, %v2813
        %v2843 = vadd.f32 %v2804, %v2813
        %v2844 = vadd.f32 %v2805, %v2813
        %v2845 = vadd.f32 %v2806, %v2813
        %v2846 = vadd.f32 %v2807, %v2813
        %v2847 = vmax.f32 %v2815, 0.0
        %v2848 = vmax.f32 %v2816, 0.0
        %v2849 = vmax.f32 %v2817, 0.0
        %v2850 = vmax.f32 %v2818, 0.0
        %v2851 = vmax.f32 %v2819, 0.0
        %v2852 = vmax.f32 %v2820, 0.0
        %v2853 = vmax.f32 %v2821, 0.0
        %v2854 = vmax.f32 %v2822, 0.0
        %v2855 = vmax.f32 %v2823, 0.0
        %v2856 = vmax.f32 %v2824, 0.0
        %v2857 = vmax.f32 %v2825, 0.0
        %v2858 = vmax.f32 %v2826, 0.0
        %v2859 = vmax.f32 %v2827, 0.0
        %v2860 = vmax.f32 %v2828, 0.0
        %v2861 = vmax.f32 %v2829, 0.0
        %v2862 = vmax.f32 %v2830, 0.0
        %v2863 = vmax.f32 %v2831, 0.0
        %v2864 = vmax.f32 %v2832, 0.0
        %v2865 = vmax.f32 %v2833, 0.0
        %v2866 = vmax.f32 %v2834, 0.0
        %v2867 = vmax.f32 %v2835, 0.0
        %v2868 = vmax.f32 %v2836, 0.0
        %v2869 = vmax.f32 %v2837, 0.0
        %v2870 = vmax.f32 %v2838, 0.0
        %v2871 = vmax.f32 %v2839, 0.0
        %v2872 = vmax.f32 %v2840, 0.0
        %v2873 = vmax.f32 %v2841, 0.0
        %v2874 = vmax.f32 %v2842, 0.0
        %v2875 = vmax.f32 %v2843, 0.0
        %v2876 = vmax.f32 %v2844, 0.0
        %v2877 = vmax.f32 %v2845, 0.0
        %v2878 = vmax.f32 %v2846, 0.0
        %v2879 = vadd.f32 %v2847, %v2848
        %v2880 = vadd.f32 %v2879, %v2849
        %v2881 = vadd.f32 %v2880, %v2850
        %v2882 = vadd.f32 %v2881, %v2851
        %v2883 = vadd.f32 %v2882, %v2852
        %v2884 = vadd.f32 %v2883, %v2853
        %v2885 = vadd.f32 %v2884, %v2854
        %v2886 = vadd.f32 %v2885, %v2855
        %v2887 = vadd.f32 %v2886, %v2856
        %v2888 = vadd.f32 %v2887, %v2857
        %v2889 = vadd.f32 %v2888, %v2858
        %v2890 = vadd.f32 %v2889, %v2859
        %v2891 = vadd.f32 %v2890, %v2860
        %v2892 = vadd.f32 %v2891, %v2861
        %v2893 = vadd.f32 %v2892, %v2862
        %v2894 = vadd.f32 %v2893, %v2863
        %v2895 = vadd.f32 %v2894, %v2864
        %v2896 = vadd.f32 %v2895, %v2865
        %v2897 = vadd.f32 %v2896, %v2866
        %v2898 = vadd.f32 %v2897, %v2867
        %v2899 = vadd.f32 %v2898, %v2868
        %v2900 = vadd.f32 %v2899, %v2869
        %v2901 = vadd.f32 %v2900, %v2870
        %v2902 = vadd.f32 %v2901, %v2871
        %v2903 = vadd.f32 %v2902, %v2872
        %v2904 = vadd.f32 %v2903, %v2873
        %v2905 = vadd.f32 %v2904, %v2874
        %v2906 = vadd.f32 %v2905, %v2875
        %v2907 = vadd.f32 %v2906, %v2876
        %v2908 = vadd.f32 %v2907, %v2877
        %v2909 = vadd.f32 %v2908, %v2878
        %v2910 = vrot.slane %v2909, 4
        %v2911 = vadd.f32 %v2909, %v2910
        %v2912 = vrot.slane %v2911, 2
        %v2913 = vadd.f32 %v2911, %v2912
        %v2914 = vrot.slane %v2913, 1
        %v2915 = vadd.f32 %v2913, %v2914
        %v2916 = vmul.f32 %v2915, 0.00390625
        %v2917 = vld [vmem:[%s3] sm:$0xff]
        %v2918 = vld [vmem:[%s3 + $0x8] sm:$0xff]
        %v2919 = vld [vmem:[%s3 + $0x10] sm:$0xff]
        %v2920 = vld [vmem:[%s3 + $0x18] sm:$0xff]
        %v2921 = vld [vmem:[%s3 + $0x20] sm:$0xff]
        %v2922 = vld [vmem:[%s3 + $0x28] sm:$0xff]
        %v2923 = vld [vmem:[%s3 + $0x30] sm:$0xff]
        %v2924 = vld [vmem:[%s3 + $0x38] sm:$0xff]
        %v2925 = vld [vmem:[%s3 + $0x40] sm:$0xff]
        %v2926 = vld [vmem:[%s3 + $0x48] sm:$0xff]
        %v2927 = vld [vmem:[%s3 + $0x50] sm:$0xff]
        %v2928 = vld [vmem:[%s3 + $0x58] sm:$0xff]
        %v2929 = vld [vmem:[%s3 + $0x60] sm:$0xff]
        %v2930 = vld [vmem:[%s3 + $0x68] sm:$0xff]
        %v2931 = vld [vmem:[%s3 + $0x70] sm:$0xff]
        %v2932 = vld [vmem:[%s3 + $0x78] sm:$0xff]
        %v2933 = vld [vmem:[%s4] sm:$0x1]
        %2934 = vmatprep.subr.mxu0 0.0
        %2935 = vmatpush1.msra.mxu0 %v2917
        %2936 = vmatprep.subr.mxu0 0.0
        %2937 = vmatpush1.msra.mxu0 %v2918
        %2938 = vmatprep.subr.mxu0 0.0
        %2939 = vmatpush1.msra.mxu0 %v2919
        %2940 = vmatprep.subr.mxu0 0.0
        %2941 = vmatpush1.msra.mxu0 %v2920
        %2942 = vmatprep.subr.mxu0 0.0
        %2943 = vmatpush1.msra.mxu0 %v2921
        %2944 = vmatprep.subr.mxu0 0.0
        %2945 = vmatpush1.msra.mxu0 %v2922
        %2946 = vmatprep.subr.mxu0 0.0
        %2947 = vmatpush1.msra.mxu0 %v2923
        %2948 = vmatprep.subr.mxu0 0.0
        %2949 = vmatpush1.msra.mxu0 %v2924
        %2950 = vmatprep.subr.mxu0 0.0
        %2951 = vmatpush1.msra.mxu0 %v2925
        %2952 = vmatprep.subr.mxu0 0.0
        %2953 = vmatpush1.msra.mxu0 %v2926
        %2954 = vmatprep.subr.mxu0 0.0
        %2955 = vmatpush1.msra.mxu0 %v2927
        %2956 = vmatprep.subr.mxu0 0.0
        %2957 = vmatpush1.msra.mxu0 %v2928
        %2958 = vmatprep.subr.mxu0 0.0
        %2959 = vmatpush1.msra.mxu0 %v2929
        %2960 = vmatprep.subr.mxu0 0.0
        %2961 = vmatpush1.msra.mxu0 %v2930
        %2962 = vmatprep.subr.mxu0 0.0
        %2963 = vmatpush1.msra.mxu0 %v2931
        %2964 = vmatprep.subr.mxu0 0.0
        %2965 = vmatpush1.msra.mxu0 %v2932
        %2966 = vmatprep.subr.mxu0 0.0
        %2967 = vmatpush1.msra.mxu0 0.0
        %2968 = vmatprep.subr.mxu0 0.0
        %2969 = vmatpush1.msra.mxu0 0.0
        %2970 = vmatprep.subr.mxu0 0.0
        %2971 = vmatpush1.msra.mxu0 0.0
        %2972 = vmatprep.subr.mxu0 0.0
        %2973 = vmatpush1.msra.mxu0 0.0
        %2974 = vmatprep.subr.mxu0 0.0
        %2975 = vmatpush1.msra.mxu0 0.0
        %2976 = vmatprep.subr.mxu0 0.0
        %2977 = vmatpush1.msra.mxu0 0.0
        %2978 = vmatprep.subr.mxu0 0.0
        %2979 = vmatpush1.msra.mxu0 0.0
        %2980 = vmatprep.subr.mxu0 0.0
        %2981 = vmatpush1.msra.mxu0 0.0
        %2982 = vmatprep.subr.mxu0 0.0
        %2983 = vmatpush1.msra.mxu0 0.0
        %2984 = vmatprep.subr.mxu0 0.0
        %2985 = vmatpush1.msra.mxu0 0.0
        %2986 = vmatprep.subr.mxu0 0.0
        %2987 = vmatpush1.msra.mxu0 0.0
        %2988 = vmatprep.subr.mxu0 0.0
        %2989 = vmatpush1.msra.mxu0 0.0
        %2990 = vmatprep.subr.mxu0 0.0
        %2991 = vmatpush1.msra.mxu0 0.0
        %2992 = vmatprep.subr.mxu0 0.0
        %2993 = vmatpush1.msra.mxu0 0.0
        %2994 = vmatprep.subr.mxu0 0.0
        %2995 = vmatpush1.msra.mxu0 0.0
        %2996 = vmatprep.subr.mxu0 0.0
        %2997 = vmatpush1.msra.mxu0 0.0
        %2998 = vmatprep.mubr.f32.mxu0 0.0
        %2999 = vmatmul.mubr.f32.gmra.mrb[0].mxu0 %v2916
        %v3000 = vpop.f32.mrb[0].mxu0
        %v3001 = vadd.f32 %v2933, %v3000
        %v3002 = vpop.f32.mrb[0].mxu0
        %3003 = vdwg.mxu0
        %3004 = vst [vmem:[%s216] sm:$0x1] %v3001
        %s3005 = sand.u32 %s137, 1
        %s3006 = scalar_lea.sflag [#allocation3], %s3005
        %s3007 = sand.u32 %s137, 1
        %s3008 = scalar_lea.vmem [#allocation2], %s3007
        // Predicated region
        $region41: #{tpu_custom_call.1} parent=39 // pred_check
          %p3009 = pneg %p147
        $region42: #{tpu_custom_call.1} parent=39 // pred_check_branch
          %3011 = sbr.rel (%p3009) target = $region44
        $region43: #{tpu_custom_call.1} parent=39 // pred_region
          %s3013 = ssub.s32 16, 16
          %3014 = vsyncadd %s3006, %s3013
          %s3015 = smul.addr %s19, 16
          %s3016 = scalar_lea.hbm %s5, %s3015
          %s3018 = sshll.u32 %s3008, 4
          %s3019 = int_to_ptr.vmem [resolvable:$true] %s3018
          %3021 = dma.vmem_to_hbm [thread:$0]  %s3019, 16, %s3016, %s3006
        $region44: #{tpu_custom_call.1} parent=39 // pred_fallthru
          _
      $region40: #{tpu_custom_call.1} parent=5 // pred_fallthru
        _
      %p3022 = scmp.le.s32.totalorder 2, %s14
      // Predicated region
      $region45: #{tpu_custom_call.1} parent=5 // pred_check
        %p3023 = pneg %p3022
      $region46: #{tpu_custom_call.1} parent=5 // pred_check_branch
        %3025 = sbr.rel (%p3023) target = $region48
      $region47: #{tpu_custom_call.1} parent=5 // pred_region
        %s3026 = ssub.s32 %s14, 2
        // Predicated region
        $region49: #{tpu_custom_call.1} parent=47 // pred_check
          %p3027 = pneg %p153
        $region50: #{tpu_custom_call.1} parent=47 // pred_check_branch
          %3029 = sbr.rel (%p3027) target = $region52
        $region51: #{tpu_custom_call.1} parent=47 // pred_region
          %s3030 = sand.u32 %s138, 1
          %s3031 = scalar_lea.sflag [#allocation3], %s3030
          %s3032 = sand.u32 %s138, 1
          %s3033 = scalar_lea.vmem [#allocation2], %s3032
          %3034 = dma.done %s3031, 16
        $region52: #{tpu_custom_call.1} parent=47 // pred_fallthru
          _
      $region48: #{tpu_custom_call.1} parent=5 // pred_fallthru
        _
    $region6: #{tpu_custom_call.1} parent=1 // loop_footer
      %s18 = sadd.s32 1, %s14
    $region7: #{tpu_custom_call.1} parent=1 // loop_footer_branch
      %13 = sbr.rel target = $region3
    $region8: #{tpu_custom_call.1} parent=1 // loop_exit
      _
    %3035 = vsyncpa [#allocation3], 1
    %s3036 = scalar_lea.sflag [#allocation3], 1
    %3037 = vsyncpa %s3036, 1

</llo_original>
